<compile_context>
chip_gen: v5e
topology: v5e:2x2
jax: 0.10.0
libtpu: 0.0.40
codegen_flags: <defaults>
</compile_context>

<pallas_src>
import functools

import jax
import jax.numpy as jnp
from jax.experimental import pallas as pl
from jax.experimental.pallas import tpu as pltpu


_VMEM_LIMIT = 48 * 1024 * 1024  # fits v7x's 64 MiB physical VMEM with headroom


def _pick_tk(k):
    """Largest K tile that divides K exactly (K is never padded)."""
    if k <= 512:
        return k
    for t in (512, 384, 256, 128):
        if k % t == 0:
            return t
    return k


# ----------------------------------------------------------------------------
# Pallas kernels
# ----------------------------------------------------------------------------

def _mm_affine_kernel(a_ref, b_ref, s_ref, c_ref, *rest, relu, has_res):
    """Tiled bf16 (M,K)@(K,N) with f32 accumulation and a fused
    per-output-channel scale/bias (+ residual add) (+ ReLU) epilogue."""
    if has_res:
        r_ref, o_ref, acc_ref = rest
    else:
        r_ref = None
        o_ref, acc_ref = rest

    @pl.when(pl.program_id(2) == 0)
    def _():
        acc_ref[...] = jnp.zeros_like(acc_ref)

    acc_ref[...] += jnp.dot(a_ref[...], b_ref[...],
                            preferred_element_type=jnp.float32)

    @pl.when(pl.program_id(2) == pl.num_programs(2) - 1)
    def _():
        y = acc_ref[...] * s_ref[...] + c_ref[...]
        if has_res:
            y = y + r_ref[...].astype(jnp.float32)
        if relu:
            y = jnp.maximum(y, 0.0)
        o_ref[...] = y.astype(o_ref.dtype)


def matmul_affine(a, b, scale, bias, *, relu, residual=None,
                  out_dtype=jnp.bfloat16):
    """out = act((a @ b) * scale + bias [+ residual]).

    a: (M, K), b: (K, N) bf16 weights, scale/bias: (N,) f32.
    Tile sizes are chosen so every block either divides the array or spans the
    full dimension, so no operand is padded or sliced at call time.
    """
    M, K = a.shape
    K2, N = b.shape
    assert K == K2
    tm = M if M <= 512 else 512
    tn = 256 if N % 256 == 0 else N
    tk = _pick_tk(K)

    grid = (pl.cdiv(M, tm), N // tn, K // tk)

    in_specs = [
        pl.BlockSpec((tm, tk), lambda i, j, k: (i, k)),
        pl.BlockSpec((tk, tn), lambda i, j, k: (k, j)),
        pl.BlockSpec((1, tn), lambda i, j, k: (0, j)),
        pl.BlockSpec((1, tn), lambda i, j, k: (0, j)),
    ]
    args = [a.astype(jnp.bfloat16), b.astype(jnp.bfloat16),
            scale.reshape(1, N).astype(jnp.float32),
            bias.reshape(1, N).astype(jnp.float32)]
    if residual is not None:
        in_specs.append(pl.BlockSpec((tm, tn), lambda i, j, k: (i, j)))
        args.append(residual.astype(jnp.bfloat16))

    return pl.pallas_call(
        functools.partial(_mm_affine_kernel, relu=relu,
                          has_res=residual is not None),
        out_shape=jax.ShapeDtypeStruct((M, N), out_dtype),
        grid_spec=pltpu.PrefetchScalarGridSpec(
            num_scalar_prefetch=0,
            grid=grid,
            in_specs=in_specs,
            out_specs=pl.BlockSpec((tm, tn), lambda i, j, k: (i, j)),
            scratch_shapes=[pltpu.VMEM((tm, tn), jnp.float32)],
        ),
        compiler_params=pltpu.CompilerParams(
            dimension_semantics=("parallel", "parallel", "arbitrary"),
            vmem_limit_bytes=_VMEM_LIMIT),
    )(*args)


def _conv3x3_kernel(x0_ref, x1_ref, x2_ref, w_ref, s_ref, c_ref, o_ref, *,
                    relu):
    """One output row of a 3x3 / stride-1 conv with fused BN (+ReLU).

    x{dy}_ref: (N, 1, W+2, Cin)  -- zero-padded input row  yo+dy
    w_ref    : (9, Cin, Cout)    -- whole weight, resident in VMEM
    o_ref    : (N, 1, W, Cout)
    The 9 taps are accumulated in-kernel, so no im2col matrix ever hits HBM.
    """
    n, _, _, cin = x0_ref.shape
    _, _, wo, cout = o_ref.shape
    xs = (x0_ref, x1_ref, x2_ref)
    acc = jnp.zeros((n * wo, cout), jnp.float32)
    for dy in range(3):
        for dx in range(3):
            a = xs[dy][:, 0, dx:dx + wo, :].reshape(n * wo, cin)
            acc = acc + jnp.dot(a, w_ref[dy * 3 + dx],
                                preferred_element_type=jnp.float32)
    y = acc * s_ref[...] + c_ref[...]
    if relu:
        y = jnp.maximum(y, 0.0)
    o_ref[...] = y.reshape(n, 1, wo, cout).astype(o_ref.dtype)


def conv3x3_s1_bn_act(x, p, relu):
    """3x3 conv (stride 1, pad 1) + folded BN + optional ReLU, NHWC bf16."""
    N, H, W, Cin = x.shape
    Cout = p["cout"]
    xp = jnp.pad(x, ((0, 0), (1, 1), (1, 1), (0, 0)))
    Wp = W + 2
    in_specs = [pl.BlockSpec((N, 1, Wp, Cin),
                             lambda yo, dy=dy: (0, yo + dy, 0, 0))
                for dy in range(3)]
    in_specs += [
        pl.BlockSpec((9, Cin, Cout), lambda yo: (0, 0, 0)),
        pl.BlockSpec((1, Cout), lambda yo: (0, 0)),
        pl.BlockSpec((1, Cout), lambda yo: (0, 0)),
    ]
    return pl.pallas_call(
        functools.partial(_conv3x3_kernel, relu=relu),
        out_shape=jax.ShapeDtypeStruct((N, H, W, Cout), jnp.bfloat16),
        grid_spec=pltpu.PrefetchScalarGridSpec(
            num_scalar_prefetch=0,
            grid=(H,),
            in_specs=in_specs,
            out_specs=pl.BlockSpec((N, 1, W, Cout), lambda yo: (0, yo, 0, 0)),
        ),
        compiler_params=pltpu.CompilerParams(
            dimension_semantics=("parallel",),
            vmem_limit_bytes=_VMEM_LIMIT),
    )(xp, xp, xp, p["w"],
      p["scale"].reshape(1, Cout), p["bias"].reshape(1, Cout))


def _avgpool_kernel(x_ref, o_ref):
    o_ref[...] = jnp.mean(x_ref[...].astype(jnp.float32), axis=1)


def global_avgpool(x):
    """AdaptiveAvgPool2d((1,1)) over NHWC, tiled along the channel axis."""
    N, H, W, C = x.shape
    xr = x.reshape(N, H * W, C)
    tc = 512 if C % 512 == 0 else C
    return pl.pallas_call(
        _avgpool_kernel,
        out_shape=jax.ShapeDtypeStruct((N, C), jnp.float32),
        grid_spec=pltpu.PrefetchScalarGridSpec(
            num_scalar_prefetch=0,
            grid=(C // tc,),
            in_specs=[pl.BlockSpec((N, H * W, tc), lambda j: (0, 0, j))],
            out_specs=pl.BlockSpec((N, tc), lambda j: (0, j)),
        ),
        compiler_params=pltpu.CompilerParams(
            dimension_semantics=("parallel",)),
    )(xr)


# ----------------------------------------------------------------------------
# Layer wrappers (glue in plain JAX, all heavy compute in Pallas)
# ----------------------------------------------------------------------------

def _im2col(x, k, stride, pad):
    N, H, W, C = x.shape
    Ho = (H + 2 * pad - k) // stride + 1
    Wo = (W + 2 * pad - k) // stride + 1
    xp = jnp.pad(x, ((0, 0), (pad, pad), (pad, pad), (0, 0)))
    cols = [xp[:, i:i + stride * (Ho - 1) + 1:stride,
               j:j + stride * (Wo - 1) + 1:stride, :]
            for i in range(k) for j in range(k)]
    patches = jnp.concatenate(cols, axis=-1)             # (N, Ho, Wo, k*k*C)
    return patches.reshape(N * Ho * Wo, k * k * C), Ho, Wo


def conv_bn_act(x, p, stride, relu, residual=None):
    """Conv2d(bias=False) + folded BatchNorm + optional (residual, ReLU)."""
    N, H, W, C = x.shape
    k = p["k"]
    if k == 1:
        xs = x if stride == 1 else x[:, ::stride, ::stride, :]
        _, Ho, Wo, _ = xs.shape
        res = None if residual is None else residual.reshape(N * Ho * Wo, -1)
        out = matmul_affine(xs.reshape(N * Ho * Wo, C), p["w"],
                            p["scale"], p["bias"], relu=relu, residual=res)
        return out.reshape(N, Ho, Wo, p["cout"])
    if k == 3 and stride == 1:
        assert residual is None
        return conv3x3_s1_bn_act(x, p, relu)
    # 7x7 stem conv and the three 3x3/stride-2 convs: im2col + flat matmul.
    assert residual is None
    patches, Ho, Wo = _im2col(x, k, stride, k // 2)
    w = p["w"].reshape(-1, p["cout"])
    out = matmul_affine(patches, w, p["scale"], p["bias"], relu=relu)
    return out.reshape(N, Ho, Wo, p["cout"])


# TODO(synk): the 3x3/2 maxpool stays as a fused XLA maximum-tree (overlapping
# strided windows do not map onto non-overlapping Blocked BlockSpecs); per the
# review this still avoids materializing the previous (9, M, C) HBM stack.
def maxpool_3x3_s2_p1(x):
    N, H, W, C = x.shape
    Ho = (H - 1) // 2 + 1
    Wo = (W - 1) // 2 + 1
    xp = jnp.pad(x, ((0, 0), (1, 1), (1, 1), (0, 0)),
                 constant_values=-jnp.inf)
    rm = xp[:, :, 0:2 * Wo - 1:2, :]
    rm = jnp.maximum(rm, xp[:, :, 1:2 * Wo:2, :])
    rm = jnp.maximum(rm, xp[:, :, 2:2 * Wo + 1:2, :])
    out = rm[:, 0:2 * Ho - 1:2, :, :]
    out = jnp.maximum(out, rm[:, 1:2 * Ho:2, :, :])
    out = jnp.maximum(out, rm[:, 2:2 * Ho + 1:2, :, :])
    return out


# ----------------------------------------------------------------------------
# Parameter construction (deterministic, synthetic)
# ----------------------------------------------------------------------------

class KeyGen:
    def __init__(self, key):
        self._key = key
        self._i = 0

    def __call__(self):
        self._i += 1
        return jax.random.fold_in(self._key, self._i)


def make_conv_bn(kg, cin, cout, k):
    # Conv weight (PyTorch layout (cout, cin, k, k)), scaled-down He init.
    w = jax.random.normal(kg(), (cout, cin, k, k), jnp.float32)
    w = w * (0.5 * (2.0 / (cin * k * k)) ** 0.5)
    # Eval-mode BatchNorm folded into per-channel scale/bias.
    gamma = jax.random.uniform(kg(), (cout,), jnp.float32, 0.5, 1.5)
    beta = 0.1 * jax.random.normal(kg(), (cout,), jnp.float32)
    mean = 0.1 * jax.random.normal(kg(), (cout,), jnp.float32)
    var = jax.random.uniform(kg(), (cout,), jnp.float32, 0.5, 1.5)
    scale = gamma / jnp.sqrt(var + 1e-5)
    bias = beta - mean * scale
    wt = jnp.transpose(w, (2, 3, 1, 0))                # (k, k, cin, cout)
    if k == 3:
        wm = wt.reshape(9, cin, cout)                  # per-tap slabs (row kernel)
    else:
        wm = wt.reshape(k * k * cin, cout)             # im2col / 1x1 layout
    return {"w": wm.astype(jnp.bfloat16), "k": k, "cout": cout,
            "scale": scale, "bias": bias}


def make_resnet152_params(key, num_classes):
    kg = KeyGen(key)
    params = {"conv1": make_conv_bn(kg, 3, 64, 7)}
    inplanes = 64
    layers = []
    cfg = [(64, 3, 1), (128, 8, 2), (256, 36, 2), (512, 3, 2)]  # ResNet-152
    for planes, nblocks, stride in cfg:
        blocks = []
        for bi in range(nblocks):
            s = stride if bi == 0 else 1
            blk = {
                "c1": make_conv_bn(kg, inplanes, planes, 1),
                "c2": make_conv_bn(kg, planes, planes, 3),
                "c3": make_conv_bn(kg, planes, planes * 4, 1),
                "stride": s,
                "down": None,
            }
            if s != 1 or inplanes != planes * 4:
                blk["down"] = make_conv_bn(kg, inplanes, planes * 4, 1)
            blocks.append(blk)
            inplanes = planes * 4
        layers.append(blocks)
    params["layers"] = layers
    # fc = Linear(2048, num_classes); stored transposed, bf16 for the MXU.
    bound = 1.0 / (2048 ** 0.5)
    params["fc_w"] = jax.random.uniform(kg(), (2048, num_classes), jnp.float32,
                                        -bound, bound).astype(jnp.bfloat16)
    params["fc_b"] = jax.random.uniform(kg(), (num_classes,), jnp.float32,
                                        -bound, bound)
    return params


# ----------------------------------------------------------------------------
# Forward pass (matches Resnet152.forward semantics, eval mode)
# ----------------------------------------------------------------------------

def bottleneck_forward(x, blk):
    out = conv_bn_act(x, blk["c1"], 1, True)
    out = conv_bn_act(out, blk["c2"], blk["stride"], True)
    if blk["down"] is not None:
        identity = conv_bn_act(x, blk["down"], blk["stride"], False)
    else:
        identity = x
    # conv3 + BN + residual add + ReLU fused into one matmul epilogue.
    return conv_bn_act(out, blk["c3"], 1, True, residual=identity)


def resnet152_forward(params, x_nchw):
    # Backbone
    x = jnp.transpose(x_nchw, (0, 2, 3, 1)).astype(jnp.bfloat16)  # NCHW -> NHWC
    x = conv_bn_act(x, params["conv1"], 2, True)
    x = maxpool_3x3_s2_p1(x)
    for blocks in params["layers"]:
        for blk in blocks:
            x = bottleneck_forward(x, blk)
    # AvgPoolFcClassifier head: AdaptiveAvgPool2d((1,1)) + flatten + Linear
    feat = global_avgpool(x)                                      # (N, 2048)
    num_classes = params["fc_w"].shape[1]
    logits = matmul_affine(feat.astype(jnp.bfloat16), params["fc_w"],
                           jnp.ones((num_classes,), jnp.float32),
                           params["fc_b"], relu=False,
                           out_dtype=jnp.float32)
    return logits                                                 # (N, classes)


if __name__ == "__main__":
    key = jax.random.PRNGKey(0)
    num_classes = 10
    params = make_resnet152_params(key, num_classes)

    # Small deterministic input (PyTorch conv layout NCHW): batch=2, 3x32x32.
    x = jax.random.normal(jax.random.fold_in(key, 9999), (2, 3, 32, 32),
                          jnp.float32)

    logits = resnet152_forward(params, x)
    logits = jax.block_until_ready(logits)

    assert logits.shape == (2, num_classes), logits.shape
    assert bool(jnp.all(jnp.isfinite(logits)))
    print("KERNEL_OK")
</pallas_src>

<mosaic_0001>
module attributes {stable_mosaic.version = 11 : i64} {
  func.func @_mm_affine_kernel(%arg0: i32, %arg1: i32, %arg2: i32, %arg3: memref<512x147xbf16, #tpu.memory_space<vmem>>, %arg4: memref<147x64xbf16, #tpu.memory_space<vmem>>, %arg5: memref<1x64xf32, #tpu.memory_space<vmem>>, %arg6: memref<1x64xf32, #tpu.memory_space<vmem>>, %arg7: memref<512x64xbf16, #tpu.memory_space<vmem>>, %arg8: memref<512x64xf32, #tpu.memory_space<vmem>>) attributes {dimension_semantics = [#tpu.dimension_semantics<parallel>, #tpu.dimension_semantics<parallel>, #tpu.dimension_semantics<arbitrary>], iteration_bounds = array<i64: 1, 1, 1>, scalar_prefetch = 0 : i64, scratch_operands = 1 : i64, tpu.core_type = #tpu.core_type<tc>, window_params = [{transform_indices = @transform_0, window_bounds = array<i64: 512, 147>}, {transform_indices = @transform_1, window_bounds = array<i64: 147, 64>}, {transform_indices = @transform_2, window_bounds = array<i64: 1, 64>}, {transform_indices = @transform_3, window_bounds = array<i64: 1, 64>}, {transform_indices = @transform_4, window_bounds = array<i64: 512, 64>}]} {
    %c0_i32 = arith.constant 0 : i32
    %0 = arith.cmpi eq, %arg2, %c0_i32 : i32
    %1 = arith.extui %0 : i1 to i32
    %c0_i32_0 = arith.constant 0 : i32
    %2 = arith.cmpi ne, %1, %c0_i32_0 : i32
    scf.if %2 {
      %cst_10 = arith.constant 0.000000e+00 : f32
      %12 = vector.broadcast %cst_10 : f32 to vector<512x64xf32>
      %c0_11 = arith.constant 0 : index
      %c0_12 = arith.constant 0 : index
      %13 = vector.load %arg8[%c0_11, %c0_12] : memref<512x64xf32, #tpu.memory_space<vmem>>, vector<512x64xf32>
      tpu.vector_store %arg8[%c0_11, %c0_12], %12 {strides = array<i32>} : memref<512x64xf32, #tpu.memory_space<vmem>>, vector<512x64xf32>,
    } else {
    }
    %c0 = arith.constant 0 : index
    %c0_1 = arith.constant 0 : index
    %3 = vector.load %arg8[%c0, %c0_1] : memref<512x64xf32, #tpu.memory_space<vmem>>, vector<512x64xf32>
    %c0_2 = arith.constant 0 : index
    %c0_3 = arith.constant 0 : index
    %4 = vector.load %arg3[%c0_2, %c0_3] : memref<512x147xbf16, #tpu.memory_space<vmem>>, vector<512x147xbf16>
    %c0_4 = arith.constant 0 : index
    %c0_5 = arith.constant 0 : index
    %5 = vector.load %arg4[%c0_4, %c0_5] : memref<147x64xbf16, #tpu.memory_space<vmem>>, vector<147x64xbf16>
    %cst = arith.constant dense<0.000000e+00> : vector<512x64xf32>
    %6 = tpu.matmul %4, %5, %cst {dimension_numbers = #tpu.dot_dimension_numbers<[1], [0], [0], [1], [0, 0, 1, 1], [], []>} : vector<512x147xbf16>, vector<147x64xbf16>, vector<512x64xf32> -> vector<512x64xf32>
    %7 = arith.addf %3, %6 : vector<512x64xf32>
    %c0_6 = arith.constant 0 : index
    %c0_7 = arith.constant 0 : index
    %8 = vector.load %arg8[%c0_6, %c0_7] : memref<512x64xf32, #tpu.memory_space<vmem>>, vector<512x64xf32>
    tpu.vector_store %arg8[%c0_6, %c0_7], %7 {strides = array<i32>} : memref<512x64xf32, #tpu.memory_space<vmem>>, vector<512x64xf32>,
    %c0_i32_8 = arith.constant 0 : i32
    %9 = arith.cmpi eq, %arg2, %c0_i32_8 : i32
    %10 = arith.extui %9 : i1 to i32
    %c0_i32_9 = arith.constant 0 : i32
    %11 = arith.cmpi ne, %10, %c0_i32_9 : i32
    scf.if %11 {
      %c0_10 = arith.constant 0 : index
      %c0_11 = arith.constant 0 : index
      %12 = vector.load %arg8[%c0_10, %c0_11] : memref<512x64xf32, #tpu.memory_space<vmem>>, vector<512x64xf32>
      %c0_12 = arith.constant 0 : index
      %c0_13 = arith.constant 0 : index
      %13 = vector.load %arg5[%c0_12, %c0_13] : memref<1x64xf32, #tpu.memory_space<vmem>>, vector<1x64xf32>
      %14 = vector.broadcast %13 : vector<1x64xf32> to vector<512x64xf32>
      %15 = arith.mulf %12, %14 : vector<512x64xf32>
      %c0_14 = arith.constant 0 : index
      %c0_15 = arith.constant 0 : index
      %16 = vector.load %arg6[%c0_14, %c0_15] : memref<1x64xf32, #tpu.memory_space<vmem>>, vector<1x64xf32>
      %17 = vector.broadcast %16 : vector<1x64xf32> to vector<512x64xf32>
      %18 = arith.addf %15, %17 : vector<512x64xf32>
      %cst_16 = arith.constant 0.000000e+00 : f32
      %19 = vector.broadcast %cst_16 : f32 to vector<512x64xf32>
      %20 = arith.maximumf %18, %19 : vector<512x64xf32>
      %21 = arith.truncf %20 : vector<512x64xf32> to vector<512x64xbf16>
      %c0_17 = arith.constant 0 : index
      %c0_18 = arith.constant 0 : index
      %22 = vector.load %arg7[%c0_17, %c0_18] : memref<512x64xbf16, #tpu.memory_space<vmem>>, vector<512x64xbf16>
      tpu.vector_store %arg7[%c0_17, %c0_18], %21 {strides = array<i32>} : memref<512x64xbf16, #tpu.memory_space<vmem>>, vector<512x64xbf16>,
    } else {
    }
    return
  }
  func.func @transform_0(%arg0: i32, %arg1: i32, %arg2: i32) -> (i32, i32) {
    %c0_i32 = arith.constant 0 : i32
    return %arg0, %arg2 : i32, i32
  }
  func.func @transform_1(%arg0: i32, %arg1: i32, %arg2: i32) -> (i32, i32) {
    %c0_i32 = arith.constant 0 : i32
    return %arg2, %arg1 : i32, i32
  }
  func.func @transform_2(%arg0: i32, %arg1: i32, %arg2: i32) -> (i32, i32) {
    %c0_i32 = arith.constant 0 : i32
    %c0_i32_0 = arith.constant 0 : i32
    return %c0_i32, %arg1 : i32, i32
  }
  func.func @transform_3(%arg0: i32, %arg1: i32, %arg2: i32) -> (i32, i32) {
    %c0_i32 = arith.constant 0 : i32
    %c0_i32_0 = arith.constant 0 : i32
    return %c0_i32, %arg1 : i32, i32
  }
  func.func @transform_4(%arg0: i32, %arg1: i32, %arg2: i32) -> (i32, i32) {
    %c0_i32 = arith.constant 0 : i32
    return %arg0, %arg1 : i32, i32
  }
}

</mosaic_0001>

<llo_original>
// kernel: tpu_custom_call.1
$region0: #{tpu_custom_call.1}
  #allocation0 [shape = 'u32[]', space=smem, size = 0x4, offset = 0x4, fixed_abs, tag = 'smem constant byte address 0x4 - core index']
  #allocation1 [shape = 'u32[72,128]{1,0:T(1,128)}', space=vmem, size = 0x9000, scoped, tag = 'internal scratch']
  #allocation2 [shape = 'f32[512,64]{1,0:T(8,128)}', space=vmem, size = 0x40000, scoped, tag = 'scratch operand']
  %s0 = inlined_call_operand.vmem [shape: bf16[512,147], index: 0, kind: input, shape index: {}]
  %s1 = inlined_call_operand.vmem [shape: bf16[147,64], index: 1, kind: input, shape index: {}]
  %s2 = inlined_call_operand.vmem [shape: f32[1,64], index: 2, kind: input, shape index: {}]
  %s3 = inlined_call_operand.vmem [shape: f32[1,64], index: 3, kind: input, shape index: {}]
  %s4 = inlined_call_operand.vmem [shape: bf16[512,64], index: 4, kind: output, shape index: {}]
  %s5 = sld [smem:[#allocation0]]
  $region34: #{tpu_custom_call.1} parent=0
    _
  %s7 = ssub.s32 1, %s5
  %s8 = scalar_select 0, %s7, %s5
  // Predicated region
  $region2: #{tpu_custom_call.1} parent=0 // pred_check
    _
  $region3: #{tpu_custom_call.1} parent=0 // pred_check_branch
    %10 = sbr.rel (0) target = $region5
  $region4: #{tpu_custom_call.1} parent=0 // pred_region
    _
  $region5: #{tpu_custom_call.1} parent=0 // pred_fallthru
    _
  // Predicated region
  $region6: #{tpu_custom_call.1} parent=0 // pred_check
    _
  $region7: #{tpu_custom_call.1} parent=0 // pred_check_branch
    %12 = sbr.rel (0) target = $region9
  $region8: #{tpu_custom_call.1} parent=0 // pred_region
    _
  $region9: #{tpu_custom_call.1} parent=0 // pred_fallthru
    _
  // Predicated region
  $region10: #{tpu_custom_call.1} parent=0 // pred_check
    _
  $region11: #{tpu_custom_call.1} parent=0 // pred_check_branch
    %14 = sbr.rel (0) target = $region13
  $region12: #{tpu_custom_call.1} parent=0 // pred_region
    _
  $region13: #{tpu_custom_call.1} parent=0 // pred_fallthru
    _
  // Predicated region
  $region14: #{tpu_custom_call.1} parent=0 // pred_check
    _
  $region15: #{tpu_custom_call.1} parent=0 // pred_check_branch
    %16 = sbr.rel (0) target = $region17
  $region16: #{tpu_custom_call.1} parent=0 // pred_region
    _
  $region17: #{tpu_custom_call.1} parent=0 // pred_fallthru
    _
  %p18 = scmp.eq.s32.totalorder 0, 0
  // Predicated region
  $region18: #{tpu_custom_call.1} parent=0 // pred_check
    %p19 = pneg %p18
  $region19: #{tpu_custom_call.1} parent=0 // pred_check_branch
    %21 = sbr.rel (%p19) target = $region21
  $region20: #{tpu_custom_call.1} parent=0 // pred_region
    %vm22 = vcmask 523264
    %23 = vst.msk [vmem:[#allocation2] sm:$0xff] %vm22, 0.0
    %24 = vst.msk [vmem:[#allocation2 + $0x8] sm:$0xff] %vm22, 0.0
    %25 = vst.msk [vmem:[#allocation2 + $0x10] sm:$0xff] %vm22, 0.0
    %26 = vst.msk [vmem:[#allocation2 + $0x18] sm:$0xff] %vm22, 0.0
    %27 = vst.msk [vmem:[#allocation2 + $0x20] sm:$0xff] %vm22, 0.0
    %28 = vst.msk [vmem:[#allocation2 + $0x28] sm:$0xff] %vm22, 0.0
    %29 = vst.msk [vmem:[#allocation2 + $0x30] sm:$0xff] %vm22, 0.0
    %30 = vst.msk [vmem:[#allocation2 + $0x38] sm:$0xff] %vm22, 0.0
    %31 = vst.msk [vmem:[#allocation2 + $0x40] sm:$0xff] %vm22, 0.0
    %32 = vst.msk [vmem:[#allocation2 + $0x48] sm:$0xff] %vm22, 0.0
    %33 = vst.msk [vmem:[#allocation2 + $0x50] sm:$0xff] %vm22, 0.0
    %34 = vst.msk [vmem:[#allocation2 + $0x58] sm:$0xff] %vm22, 0.0
    %35 = vst.msk [vmem:[#allocation2 + $0x60] sm:$0xff] %vm22, 0.0
    %36 = vst.msk [vmem:[#allocation2 + $0x68] sm:$0xff] %vm22, 0.0
    %37 = vst.msk [vmem:[#allocation2 + $0x70] sm:$0xff] %vm22, 0.0
    %38 = vst.msk [vmem:[#allocation2 + $0x78] sm:$0xff] %vm22, 0.0
    %39 = vst.msk [vmem:[#allocation2 + $0x80] sm:$0xff] %vm22, 0.0
    %40 = vst.msk [vmem:[#allocation2 + $0x88] sm:$0xff] %vm22, 0.0
    %41 = vst.msk [vmem:[#allocation2 + $0x90] sm:$0xff] %vm22, 0.0
    %42 = vst.msk [vmem:[#allocation2 + $0x98] sm:$0xff] %vm22, 0.0
    %43 = vst.msk [vmem:[#allocation2 + $0xa0] sm:$0xff] %vm22, 0.0
    %44 = vst.msk [vmem:[#allocation2 + $0xa8] sm:$0xff] %vm22, 0.0
    %45 = vst.msk [vmem:[#allocation2 + $0xb0] sm:$0xff] %vm22, 0.0
    %46 = vst.msk [vmem:[#allocation2 + $0xb8] sm:$0xff] %vm22, 0.0
    %47 = vst.msk [vmem:[#allocation2 + $0xc0] sm:$0xff] %vm22, 0.0
    %48 = vst.msk [vmem:[#allocation2 + $0xc8] sm:$0xff] %vm22, 0.0
    %49 = vst.msk [vmem:[#allocation2 + $0xd0] sm:$0xff] %vm22, 0.0
    %50 = vst.msk [vmem:[#allocation2 + $0xd8] sm:$0xff] %vm22, 0.0
    %51 = vst.msk [vmem:[#allocation2 + $0xe0] sm:$0xff] %vm22, 0.0
    %52 = vst.msk [vmem:[#allocation2 + $0xe8] sm:$0xff] %vm22, 0.0
    %53 = vst.msk [vmem:[#allocation2 + $0xf0] sm:$0xff] %vm22, 0.0
    %54 = vst.msk [vmem:[#allocation2 + $0xf8] sm:$0xff] %vm22, 0.0
    %55 = vst.msk [vmem:[#allocation2 + $0x100] sm:$0xff] %vm22, 0.0
    %56 = vst.msk [vmem:[#allocation2 + $0x108] sm:$0xff] %vm22, 0.0
    %57 = vst.msk [vmem:[#allocation2 + $0x110] sm:$0xff] %vm22, 0.0
    %58 = vst.msk [vmem:[#allocation2 + $0x118] sm:$0xff] %vm22, 0.0
    %59 = vst.msk [vmem:[#allocation2 + $0x120] sm:$0xff] %vm22, 0.0
    %60 = vst.msk [vmem:[#allocation2 + $0x128] sm:$0xff] %vm22, 0.0
    %61 = vst.msk [vmem:[#allocation2 + $0x130] sm:$0xff] %vm22, 0.0
    %62 = vst.msk [vmem:[#allocation2 + $0x138] sm:$0xff] %vm22, 0.0
    %63 = vst.msk [vmem:[#allocation2 + $0x140] sm:$0xff] %vm22, 0.0
    %64 = vst.msk [vmem:[#allocation2 + $0x148] sm:$0xff] %vm22, 0.0
    %65 = vst.msk [vmem:[#allocation2 + $0x150] sm:$0xff] %vm22, 0.0
    %66 = vst.msk [vmem:[#allocation2 + $0x158] sm:$0xff] %vm22, 0.0
    %67 = vst.msk [vmem:[#allocation2 + $0x160] sm:$0xff] %vm22, 0.0
    %68 = vst.msk [vmem:[#allocation2 + $0x168] sm:$0xff] %vm22, 0.0
    %69 = vst.msk [vmem:[#allocation2 + $0x170] sm:$0xff] %vm22, 0.0
    %70 = vst.msk [vmem:[#allocation2 + $0x178] sm:$0xff] %vm22, 0.0
    %71 = vst.msk [vmem:[#allocation2 + $0x180] sm:$0xff] %vm22, 0.0
    %72 = vst.msk [vmem:[#allocation2 + $0x188] sm:$0xff] %vm22, 0.0
    %73 = vst.msk [vmem:[#allocation2 + $0x190] sm:$0xff] %vm22, 0.0
    %74 = vst.msk [vmem:[#allocation2 + $0x198] sm:$0xff] %vm22, 0.0
    %75 = vst.msk [vmem:[#allocation2 + $0x1a0] sm:$0xff] %vm22, 0.0
    %76 = vst.msk [vmem:[#allocation2 + $0x1a8] sm:$0xff] %vm22, 0.0
    %77 = vst.msk [vmem:[#allocation2 + $0x1b0] sm:$0xff] %vm22, 0.0
    %78 = vst.msk [vmem:[#allocation2 + $0x1b8] sm:$0xff] %vm22, 0.0
    %79 = vst.msk [vmem:[#allocation2 + $0x1c0] sm:$0xff] %vm22, 0.0
    %80 = vst.msk [vmem:[#allocation2 + $0x1c8] sm:$0xff] %vm22, 0.0
    %81 = vst.msk [vmem:[#allocation2 + $0x1d0] sm:$0xff] %vm22, 0.0
    %82 = vst.msk [vmem:[#allocation2 + $0x1d8] sm:$0xff] %vm22, 0.0
    %83 = vst.msk [vmem:[#allocation2 + $0x1e0] sm:$0xff] %vm22, 0.0
    %84 = vst.msk [vmem:[#allocation2 + $0x1e8] sm:$0xff] %vm22, 0.0
    %85 = vst.msk [vmem:[#allocation2 + $0x1f0] sm:$0xff] %vm22, 0.0
    %86 = vst.msk [vmem:[#allocation2 + $0x1f8] sm:$0xff] %vm22, 0.0
  $region21: #{tpu_custom_call.1} parent=0 // pred_fallthru
    _
  %v87 = vld [vmem:[#allocation2] sm:$0xff]
  %v88 = vld [vmem:[#allocation2 + $0x8] sm:$0xff]
  %v89 = vld [vmem:[#allocation2 + $0x10] sm:$0xff]
  %v90 = vld [vmem:[#allocation2 + $0x18] sm:$0xff]
  %v91 = vld [vmem:[#allocation2 + $0x20] sm:$0xff]
  %v92 = vld [vmem:[#allocation2 + $0x28] sm:$0xff]
  %v93 = vld [vmem:[#allocation2 + $0x30] sm:$0xff]
  %v94 = vld [vmem:[#allocation2 + $0x38] sm:$0xff]
  %v95 = vld [vmem:[#allocation2 + $0x40] sm:$0xff]
  %v96 = vld [vmem:[#allocation2 + $0x48] sm:$0xff]
  %v97 = vld [vmem:[#allocation2 + $0x50] sm:$0xff]
  %v98 = vld [vmem:[#allocation2 + $0x58] sm:$0xff]
  %v99 = vld [vmem:[#allocation2 + $0x60] sm:$0xff]
  %v100 = vld [vmem:[#allocation2 + $0x68] sm:$0xff]
  %v101 = vld [vmem:[#allocation2 + $0x70] sm:$0xff]
  %v102 = vld [vmem:[#allocation2 + $0x78] sm:$0xff]
  %v103 = vld [vmem:[#allocation2 + $0x80] sm:$0xff]
  %v104 = vld [vmem:[#allocation2 + $0x88] sm:$0xff]
  %v105 = vld [vmem:[#allocation2 + $0x90] sm:$0xff]
  %v106 = vld [vmem:[#allocation2 + $0x98] sm:$0xff]
  %v107 = vld [vmem:[#allocation2 + $0xa0] sm:$0xff]
  %v108 = vld [vmem:[#allocation2 + $0xa8] sm:$0xff]
  %v109 = vld [vmem:[#allocation2 + $0xb0] sm:$0xff]
  %v110 = vld [vmem:[#allocation2 + $0xb8] sm:$0xff]
  %v111 = vld [vmem:[#allocation2 + $0xc0] sm:$0xff]
  %v112 = vld [vmem:[#allocation2 + $0xc8] sm:$0xff]
  %v113 = vld [vmem:[#allocation2 + $0xd0] sm:$0xff]
  %v114 = vld [vmem:[#allocation2 + $0xd8] sm:$0xff]
  %v115 = vld [vmem:[#allocation2 + $0xe0] sm:$0xff]
  %v116 = vld [vmem:[#allocation2 + $0xe8] sm:$0xff]
  %v117 = vld [vmem:[#allocation2 + $0xf0] sm:$0xff]
  %v118 = vld [vmem:[#allocation2 + $0xf8] sm:$0xff]
  %v119 = vld [vmem:[#allocation2 + $0x100] sm:$0xff]
  %v120 = vld [vmem:[#allocation2 + $0x108] sm:$0xff]
  %v121 = vld [vmem:[#allocation2 + $0x110] sm:$0xff]
  %v122 = vld [vmem:[#allocation2 + $0x118] sm:$0xff]
  %v123 = vld [vmem:[#allocation2 + $0x120] sm:$0xff]
  %v124 = vld [vmem:[#allocation2 + $0x128] sm:$0xff]
  %v125 = vld [vmem:[#allocation2 + $0x130] sm:$0xff]
  %v126 = vld [vmem:[#allocation2 + $0x138] sm:$0xff]
  %v127 = vld [vmem:[#allocation2 + $0x140] sm:$0xff]
  %v128 = vld [vmem:[#allocation2 + $0x148] sm:$0xff]
  %v129 = vld [vmem:[#allocation2 + $0x150] sm:$0xff]
  %v130 = vld [vmem:[#allocation2 + $0x158] sm:$0xff]
  %v131 = vld [vmem:[#allocation2 + $0x160] sm:$0xff]
  %v132 = vld [vmem:[#allocation2 + $0x168] sm:$0xff]
  %v133 = vld [vmem:[#allocation2 + $0x170] sm:$0xff]
  %v134 = vld [vmem:[#allocation2 + $0x178] sm:$0xff]
  %v135 = vld [vmem:[#allocation2 + $0x180] sm:$0xff]
  %v136 = vld [vmem:[#allocation2 + $0x188] sm:$0xff]
  %v137 = vld [vmem:[#allocation2 + $0x190] sm:$0xff]
  %v138 = vld [vmem:[#allocation2 + $0x198] sm:$0xff]
  %v139 = vld [vmem:[#allocation2 + $0x1a0] sm:$0xff]
  %v140 = vld [vmem:[#allocation2 + $0x1a8] sm:$0xff]
  %v141 = vld [vmem:[#allocation2 + $0x1b0] sm:$0xff]
  %v142 = vld [vmem:[#allocation2 + $0x1b8] sm:$0xff]
  %v143 = vld [vmem:[#allocation2 + $0x1c0] sm:$0xff]
  %v144 = vld [vmem:[#allocation2 + $0x1c8] sm:$0xff]
  %v145 = vld [vmem:[#allocation2 + $0x1d0] sm:$0xff]
  %v146 = vld [vmem:[#allocation2 + $0x1d8] sm:$0xff]
  %v147 = vld [vmem:[#allocation2 + $0x1e0] sm:$0xff]
  %v148 = vld [vmem:[#allocation2 + $0x1e8] sm:$0xff]
  %v149 = vld [vmem:[#allocation2 + $0x1f0] sm:$0xff]
  %v150 = vld [vmem:[#allocation2 + $0x1f8] sm:$0xff]
  %v151 = vld [vmem:[%s0] sm:$0xff]
  %v152 = vld [vmem:[%s0 + $0x8] sm:$0xff]
  %v153 = vld [vmem:[%s0 + $0x10] sm:$0xff]
  %v154 = vld [vmem:[%s0 + $0x18] sm:$0xff]
  %v155 = vld [vmem:[%s0 + $0x20] sm:$0xff]
  %v156 = vld [vmem:[%s0 + $0x28] sm:$0xff]
  %v157 = vld [vmem:[%s0 + $0x30] sm:$0xff]
  %v158 = vld [vmem:[%s0 + $0x38] sm:$0xff]
  %v159 = vld [vmem:[%s0 + $0x40] sm:$0xff]
  %v160 = vld [vmem:[%s0 + $0x48] sm:$0xff]
  %v161 = vld [vmem:[%s0 + $0x50] sm:$0xff]
  %v162 = vld [vmem:[%s0 + $0x58] sm:$0xff]
  %v163 = vld [vmem:[%s0 + $0x60] sm:$0xff]
  %v164 = vld [vmem:[%s0 + $0x68] sm:$0xff]
  %v165 = vld [vmem:[%s0 + $0x70] sm:$0xff]
  %v166 = vld [vmem:[%s0 + $0x78] sm:$0xff]
  %v167 = vld [vmem:[%s0 + $0x80] sm:$0xff]
  %v168 = vld [vmem:[%s0 + $0x88] sm:$0xff]
  %v169 = vld [vmem:[%s0 + $0x90] sm:$0xff]
  %v170 = vld [vmem:[%s0 + $0x98] sm:$0xff]
  %v171 = vld [vmem:[%s0 + $0xa0] sm:$0xff]
  %v172 = vld [vmem:[%s0 + $0xa8] sm:$0xff]
  %v173 = vld [vmem:[%s0 + $0xb0] sm:$0xff]
  %v174 = vld [vmem:[%s0 + $0xb8] sm:$0xff]
  %v175 = vld [vmem:[%s0 + $0xc0] sm:$0xff]
  %v176 = vld [vmem:[%s0 + $0xc8] sm:$0xff]
  %v177 = vld [vmem:[%s0 + $0xd0] sm:$0xff]
  %v178 = vld [vmem:[%s0 + $0xd8] sm:$0xff]
  %v179 = vld [vmem:[%s0 + $0xe0] sm:$0xff]
  %v180 = vld [vmem:[%s0 + $0xe8] sm:$0xff]
  %v181 = vld [vmem:[%s0 + $0xf0] sm:$0xff]
  %v182 = vld [vmem:[%s0 + $0xf8] sm:$0xff]
  %v183 = vld [vmem:[%s0 + $0x100] sm:$0xff]
  %v184 = vld [vmem:[%s0 + $0x108] sm:$0xff]
  %v185 = vld [vmem:[%s0 + $0x110] sm:$0xff]
  %v186 = vld [vmem:[%s0 + $0x118] sm:$0xff]
  %v187 = vld [vmem:[%s0 + $0x120] sm:$0xff]
  %v188 = vld [vmem:[%s0 + $0x128] sm:$0xff]
  %v189 = vld [vmem:[%s0 + $0x130] sm:$0xff]
  %v190 = vld [vmem:[%s0 + $0x138] sm:$0xff]
  %v191 = vld [vmem:[%s0 + $0x140] sm:$0xff]
  %v192 = vld [vmem:[%s0 + $0x148] sm:$0xff]
  %v193 = vld [vmem:[%s0 + $0x150] sm:$0xff]
  %v194 = vld [vmem:[%s0 + $0x158] sm:$0xff]
  %v195 = vld [vmem:[%s0 + $0x160] sm:$0xff]
  %v196 = vld [vmem:[%s0 + $0x168] sm:$0xff]
  %v197 = vld [vmem:[%s0 + $0x170] sm:$0xff]
  %v198 = vld [vmem:[%s0 + $0x178] sm:$0xff]
  %v199 = vld [vmem:[%s0 + $0x180] sm:$0xff]
  %v200 = vld [vmem:[%s0 + $0x188] sm:$0xff]
  %v201 = vld [vmem:[%s0 + $0x190] sm:$0xff]
  %v202 = vld [vmem:[%s0 + $0x198] sm:$0xff]
  %v203 = vld [vmem:[%s0 + $0x1a0] sm:$0xff]
  %v204 = vld [vmem:[%s0 + $0x1a8] sm:$0xff]
  %v205 = vld [vmem:[%s0 + $0x1b0] sm:$0xff]
  %v206 = vld [vmem:[%s0 + $0x1b8] sm:$0xff]
  %v207 = vld [vmem:[%s0 + $0x1c0] sm:$0xff]
  %v208 = vld [vmem:[%s0 + $0x1c8] sm:$0xff]
  %v209 = vld [vmem:[%s0 + $0x1d0] sm:$0xff]
  %v210 = vld [vmem:[%s0 + $0x1d8] sm:$0xff]
  %v211 = vld [vmem:[%s0 + $0x1e0] sm:$0xff]
  %v212 = vld [vmem:[%s0 + $0x1e8] sm:$0xff]
  %v213 = vld [vmem:[%s0 + $0x1f0] sm:$0xff]
  %v214 = vld [vmem:[%s0 + $0x1f8] sm:$0xff]
  %v215 = vld [vmem:[%s1] sm:$0xf]
  %v216 = vld [vmem:[%s1 + $0x4] sm:$0xf]
  %v217 = vld [vmem:[%s1 + $0x8] sm:$0xf]
  %v218 = vld [vmem:[%s1 + $0xc] sm:$0xf]
  %v219 = vld [vmem:[%s1 + $0x10] sm:$0xf]
  %v220 = vld [vmem:[%s1 + $0x14] sm:$0xf]
  %v221 = vld [vmem:[%s1 + $0x18] sm:$0xf]
  %v222 = vld [vmem:[%s1 + $0x1c] sm:$0xf]
  %v223 = vld [vmem:[%s1 + $0x20] sm:$0xf]
  %v224 = vld [vmem:[%s1 + $0x24] sm:$0xf]
  %v225 = vld [vmem:[%s1 + $0x28] sm:$0xf]
  %v226 = vld [vmem:[%s1 + $0x2c] sm:$0xf]
  %v227 = vld [vmem:[%s1 + $0x30] sm:$0xf]
  %v228 = vld [vmem:[%s1 + $0x34] sm:$0xf]
  %v229 = vld [vmem:[%s1 + $0x38] sm:$0xf]
  %v230 = vld [vmem:[%s1 + $0x3c] sm:$0xf]
  %v231 = vld [vmem:[%s1 + $0x40] sm:$0xf]
  %v232 = vld [vmem:[%s1 + $0x44] sm:$0xf]
  %v233 = vld [vmem:[%s1 + $0x48] sm:$0x3]
  %v298 = vunpack.c.l.b16 %v151
  %v299 = vunpack.c.h.b16 %v151
  %v300 = vunpack.c.l.b16 %v152
  %v301 = vunpack.c.h.b16 %v152
  %v302 = vunpack.c.l.b16 %v153
  %v303 = vunpack.c.h.b16 %v153
  %v304 = vunpack.c.l.b16 %v154
  %v305 = vunpack.c.h.b16 %v154
  %v306 = vunpack.c.l.b16 %v155
  %v307 = vunpack.c.h.b16 %v155
  %v308 = vunpack.c.l.b16 %v156
  %v309 = vunpack.c.h.b16 %v156
  %v310 = vunpack.c.l.b16 %v157
  %v311 = vunpack.c.h.b16 %v157
  %v312 = vunpack.c.l.b16 %v158
  %v313 = vunpack.c.h.b16 %v158
  %v314 = vunpack.c.l.b16 %v159
  %v315 = vunpack.c.h.b16 %v159
  %v316 = vunpack.c.l.b16 %v160
  %v317 = vunpack.c.h.b16 %v160
  %v318 = vunpack.c.l.b16 %v161
  %v319 = vunpack.c.h.b16 %v161
  %v320 = vunpack.c.l.b16 %v162
  %v321 = vunpack.c.h.b16 %v162
  %v322 = vunpack.c.l.b16 %v163
  %v323 = vunpack.c.h.b16 %v163
  %v324 = vunpack.c.l.b16 %v164
  %v325 = vunpack.c.h.b16 %v164
  %v326 = vunpack.c.l.b16 %v165
  %v327 = vunpack.c.h.b16 %v165
  %v328 = vunpack.c.l.b16 %v166
  %v329 = vunpack.c.h.b16 %v166
  %v330 = vunpack.c.l.b16 %v167
  %v331 = vunpack.c.h.b16 %v167
  %v332 = vunpack.c.l.b16 %v168
  %v333 = vunpack.c.h.b16 %v168
  %v334 = vunpack.c.l.b16 %v169
  %v335 = vunpack.c.h.b16 %v169
  %v336 = vunpack.c.l.b16 %v170
  %v337 = vunpack.c.h.b16 %v170
  %v338 = vunpack.c.l.b16 %v171
  %v339 = vunpack.c.h.b16 %v171
  %v340 = vunpack.c.l.b16 %v172
  %v341 = vunpack.c.h.b16 %v172
  %v342 = vunpack.c.l.b16 %v173
  %v343 = vunpack.c.h.b16 %v173
  %v344 = vunpack.c.l.b16 %v174
  %v345 = vunpack.c.h.b16 %v174
  %v346 = vunpack.c.l.b16 %v175
  %v347 = vunpack.c.h.b16 %v175
  %v348 = vunpack.c.l.b16 %v176
  %v349 = vunpack.c.h.b16 %v176
  %v350 = vunpack.c.l.b16 %v177
  %v351 = vunpack.c.h.b16 %v177
  %v352 = vunpack.c.l.b16 %v178
  %v353 = vunpack.c.h.b16 %v178
  %v354 = vunpack.c.l.b16 %v179
  %v355 = vunpack.c.h.b16 %v179
  %v356 = vunpack.c.l.b16 %v180
  %v357 = vunpack.c.h.b16 %v180
  %v358 = vunpack.c.l.b16 %v181
  %v359 = vunpack.c.h.b16 %v181
  %v360 = vunpack.c.l.b16 %v182
  %v361 = vunpack.c.h.b16 %v182
  %v362 = vunpack.c.l.b16 %v183
  %v363 = vunpack.c.h.b16 %v183
  %v364 = vunpack.c.l.b16 %v184
  %v365 = vunpack.c.h.b16 %v184
  %v366 = vunpack.c.l.b16 %v185
  %v367 = vunpack.c.h.b16 %v185
  %v368 = vunpack.c.l.b16 %v186
  %v369 = vunpack.c.h.b16 %v186
  %v370 = vunpack.c.l.b16 %v187
  %v371 = vunpack.c.h.b16 %v187
  %v372 = vunpack.c.l.b16 %v188
  %v373 = vunpack.c.h.b16 %v188
  %v374 = vunpack.c.l.b16 %v189
  %v375 = vunpack.c.h.b16 %v189
  %v376 = vunpack.c.l.b16 %v190
  %v377 = vunpack.c.h.b16 %v190
  %v378 = vunpack.c.l.b16 %v191
  %v379 = vunpack.c.h.b16 %v191
  %v380 = vunpack.c.l.b16 %v192
  %v381 = vunpack.c.h.b16 %v192
  %v382 = vunpack.c.l.b16 %v193
  %v383 = vunpack.c.h.b16 %v193
  %v384 = vunpack.c.l.b16 %v194
  %v385 = vunpack.c.h.b16 %v194
  %v386 = vunpack.c.l.b16 %v195
  %v387 = vunpack.c.h.b16 %v195
  %v388 = vunpack.c.l.b16 %v196
  %v389 = vunpack.c.h.b16 %v196
  %v390 = vunpack.c.l.b16 %v197
  %v391 = vunpack.c.h.b16 %v197
  %v392 = vunpack.c.l.b16 %v198
  %v393 = vunpack.c.h.b16 %v198
  %v394 = vunpack.c.l.b16 %v199
  %v395 = vunpack.c.h.b16 %v199
  %v396 = vunpack.c.l.b16 %v200
  %v397 = vunpack.c.h.b16 %v200
  %v398 = vunpack.c.l.b16 %v201
  %v399 = vunpack.c.h.b16 %v201
  %v400 = vunpack.c.l.b16 %v202
  %v401 = vunpack.c.h.b16 %v202
  %v402 = vunpack.c.l.b16 %v203
  %v403 = vunpack.c.h.b16 %v203
  %v404 = vunpack.c.l.b16 %v204
  %v405 = vunpack.c.h.b16 %v204
  %v406 = vunpack.c.l.b16 %v205
  %v407 = vunpack.c.h.b16 %v205
  %v408 = vunpack.c.l.b16 %v206
  %v409 = vunpack.c.h.b16 %v206
  %v410 = vunpack.c.l.b16 %v207
  %v411 = vunpack.c.h.b16 %v207
  %v412 = vunpack.c.l.b16 %v208
  %v413 = vunpack.c.h.b16 %v208
  %v414 = vunpack.c.l.b16 %v209
  %v415 = vunpack.c.h.b16 %v209
  %v416 = vunpack.c.l.b16 %v210
  %v417 = vunpack.c.h.b16 %v210
  %v418 = vunpack.c.l.b16 %v211
  %v419 = vunpack.c.h.b16 %v211
  %v420 = vunpack.c.l.b16 %v212
  %v421 = vunpack.c.h.b16 %v212
  %v422 = vunpack.c.l.b16 %v213
  %v423 = vunpack.c.h.b16 %v213
  %v424 = vunpack.c.l.b16 %v214
  %v425 = vunpack.c.h.b16 %v214
  %v426 = vpack.c.b16 %v300, %v298
  %v427 = vpack.c.b16 %v301, %v299
  %v428 = vpack.c.b16 %v304, %v302
  %v429 = vpack.c.b16 %v305, %v303
  %v430 = vpack.c.b16 %v308, %v306
  %v431 = vpack.c.b16 %v309, %v307
  %v432 = vpack.c.b16 %v312, %v310
  %v433 = vpack.c.b16 %v313, %v311
  %v434 = vpack.c.b16 %v316, %v314
  %v435 = vpack.c.b16 %v317, %v315
  %v436 = vpack.c.b16 %v320, %v318
  %v437 = vpack.c.b16 %v321, %v319
  %v438 = vpack.c.b16 %v324, %v322
  %v439 = vpack.c.b16 %v325, %v323
  %v440 = vpack.c.b16 %v328, %v326
  %v441 = vpack.c.b16 %v329, %v327
  %v442 = vpack.c.b16 %v332, %v330
  %v443 = vpack.c.b16 %v333, %v331
  %v444 = vpack.c.b16 %v336, %v334
  %v445 = vpack.c.b16 %v337, %v335
  %v446 = vpack.c.b16 %v340, %v338
  %v447 = vpack.c.b16 %v341, %v339
  %v448 = vpack.c.b16 %v344, %v342
  %v449 = vpack.c.b16 %v345, %v343
  %v450 = vpack.c.b16 %v348, %v346
  %v451 = vpack.c.b16 %v349, %v347
  %v452 = vpack.c.b16 %v352, %v350
  %v453 = vpack.c.b16 %v353, %v351
  %v454 = vpack.c.b16 %v356, %v354
  %v455 = vpack.c.b16 %v357, %v355
  %v456 = vpack.c.b16 %v360, %v358
  %v457 = vpack.c.b16 %v361, %v359
  %v458 = vpack.c.b16 %v364, %v362
  %v459 = vpack.c.b16 %v365, %v363
  %v460 = vpack.c.b16 %v368, %v366
  %v461 = vpack.c.b16 %v369, %v367
  %v462 = vpack.c.b16 %v372, %v370
  %v463 = vpack.c.b16 %v373, %v371
  %v464 = vpack.c.b16 %v376, %v374
  %v465 = vpack.c.b16 %v377, %v375
  %v466 = vpack.c.b16 %v380, %v378
  %v467 = vpack.c.b16 %v381, %v379
  %v468 = vpack.c.b16 %v384, %v382
  %v469 = vpack.c.b16 %v385, %v383
  %v470 = vpack.c.b16 %v388, %v386
  %v471 = vpack.c.b16 %v389, %v387
  %v472 = vpack.c.b16 %v392, %v390
  %v473 = vpack.c.b16 %v393, %v391
  %v474 = vpack.c.b16 %v396, %v394
  %v475 = vpack.c.b16 %v397, %v395
  %v476 = vpack.c.b16 %v400, %v398
  %v477 = vpack.c.b16 %v401, %v399
  %v478 = vpack.c.b16 %v404, %v402
  %v479 = vpack.c.b16 %v405, %v403
  %v480 = vpack.c.b16 %v408, %v406
  %v481 = vpack.c.b16 %v409, %v407
  %v482 = vpack.c.b16 %v412, %v410
  %v483 = vpack.c.b16 %v413, %v411
  %v484 = vpack.c.b16 %v416, %v414
  %v485 = vpack.c.b16 %v417, %v415
  %v486 = vpack.c.b16 %v420, %v418
  %v487 = vpack.c.b16 %v421, %v419
  %v488 = vpack.c.b16 %v424, %v422
  %v489 = vpack.c.b16 %v425, %v423
  %v541 = vunpack.c.l.b16 %v215
  %v542 = vunpack.c.l.b16 %v216
  %v543 = vunpack.c.l.b16 %v217
  %v544 = vunpack.c.l.b16 %v218
  %v545 = vunpack.c.l.b16 %v219
  %v546 = vunpack.c.l.b16 %v220
  %v547 = vunpack.c.l.b16 %v221
  %v548 = vunpack.c.l.b16 %v222
  %v549 = vunpack.c.l.b16 %v223
  %v550 = vunpack.c.l.b16 %v224
  %v551 = vunpack.c.l.b16 %v225
  %v552 = vunpack.c.l.b16 %v226
  %v553 = vunpack.c.l.b16 %v227
  %v554 = vunpack.c.l.b16 %v228
  %v555 = vunpack.c.l.b16 %v229
  %v556 = vunpack.c.l.b16 %v230
  %v557 = vunpack.c.l.b16 %v231
  %v558 = vunpack.c.l.b16 %v232
  %v559 = vunpack.c.l.b16 %v233
  %v560 = vpack.c.b16 %v542, %v541
  %v561 = vpack.c.b16 %v544, %v543
  %v562 = vpack.c.b16 %v546, %v545
  %v563 = vpack.c.b16 %v548, %v547
  %v564 = vpack.c.b16 %v550, %v549
  %v565 = vpack.c.b16 %v552, %v551
  %v566 = vpack.c.b16 %v554, %v553
  %v567 = vpack.c.b16 %v556, %v555
  %v568 = vpack.c.b16 %v558, %v557
  %v569 = vpack.c.b16 %v559, %v559
  %vm579 = vcmask 154624
  %v581 = vsel %vm579, %v427, 0
  %v584 = vsel %vm579, %v429, 0
  %v587 = vsel %vm579, %v431, 0
  %v590 = vsel %vm579, %v433, 0
  %v593 = vsel %vm579, %v435, 0
  %v596 = vsel %vm579, %v437, 0
  %v599 = vsel %vm579, %v439, 0
  %v602 = vsel %vm579, %v441, 0
  %v605 = vsel %vm579, %v443, 0
  %v608 = vsel %vm579, %v445, 0
  %v611 = vsel %vm579, %v447, 0
  %v614 = vsel %vm579, %v449, 0
  %v617 = vsel %vm579, %v451, 0
  %v620 = vsel %vm579, %v453, 0
  %v623 = vsel %vm579, %v455, 0
  %v626 = vsel %vm579, %v457, 0
  %v629 = vsel %vm579, %v459, 0
  %v632 = vsel %vm579, %v461, 0
  %v635 = vsel %vm579, %v463, 0
  %v638 = vsel %vm579, %v465, 0
  %v641 = vsel %vm579, %v467, 0
  %v644 = vsel %vm579, %v469, 0
  %v647 = vsel %vm579, %v471, 0
  %v650 = vsel %vm579, %v473, 0
  %v653 = vsel %vm579, %v475, 0
  %v656 = vsel %vm579, %v477, 0
  %v659 = vsel %vm579, %v479, 0
  %v662 = vsel %vm579, %v481, 0
  %v665 = vsel %vm579, %v483, 0
  %v668 = vsel %vm579, %v485, 0
  %v671 = vsel %vm579, %v487, 0
  %v674 = vsel %vm579, %v489, 0
  %vm676 = vcmask 1040384
  %vm677 = vcmask 1041408
  %v678 = vsel %vm676, 4294967295, 65535
  %v679 = vsel %vm677, %v678, 0
  %v681 = vand.u32 %v569, %v679
  %683 = vmatpush.bf16.msra.mxu0 %v567
  %684 = vmatpush.bf16.msra.mxu0 %v566
  %685 = vmatpush.bf16.msra.mxu0 %v565
  %686 = vmatpush.bf16.msra.mxu0 %v564
  %687 = vmatpush.bf16.msra.mxu0 %v563
  %688 = vmatpush.bf16.msra.mxu0 %v562
  %689 = vmatpush.bf16.msra.mxu0 %v561
  %690 = vmatpush.bf16.msra.mxu0 %v560
  %691 = vmatmul.bf16.gmra.mxu0 %v426
  %v692 = vpop.f32.mrf.mxu0
  %v693 = vadd.f32 0.0, %v692
  %v694 = vpop.f32.mrf.mxu0
  %v695 = vadd.f32 0.0, %v694
  %696 = vmatmul.bf16.gmra.mxu0 %v428
  %v697 = vpop.f32.mrf.mxu0
  %v698 = vadd.f32 0.0, %v697
  %v699 = vpop.f32.mrf.mxu0
  %v700 = vadd.f32 0.0, %v699
  %701 = vmatmul.bf16.gmra.mxu0 %v430
  %v702 = vpop.f32.mrf.mxu0
  %v703 = vadd.f32 0.0, %v702
  %v704 = vpop.f32.mrf.mxu0
  %v705 = vadd.f32 0.0, %v704
  %706 = vmatmul.bf16.gmra.mxu0 %v432
  %v707 = vpop.f32.mrf.mxu0
  %v708 = vadd.f32 0.0, %v707
  %v709 = vpop.f32.mrf.mxu0
  %v710 = vadd.f32 0.0, %v709
  %711 = vmatmul.bf16.gmra.mxu0 %v434
  %v712 = vpop.f32.mrf.mxu0
  %v713 = vadd.f32 0.0, %v712
  %v714 = vpop.f32.mrf.mxu0
  %v715 = vadd.f32 0.0, %v714
  %716 = vmatmul.bf16.gmra.mxu0 %v436
  %v717 = vpop.f32.mrf.mxu0
  %v718 = vadd.f32 0.0, %v717
  %v719 = vpop.f32.mrf.mxu0
  %v720 = vadd.f32 0.0, %v719
  %721 = vmatmul.bf16.gmra.mxu0 %v438
  %v722 = vpop.f32.mrf.mxu0
  %v723 = vadd.f32 0.0, %v722
  %v724 = vpop.f32.mrf.mxu0
  %v725 = vadd.f32 0.0, %v724
  %726 = vmatmul.bf16.gmra.mxu0 %v440
  %v727 = vpop.f32.mrf.mxu0
  %v728 = vadd.f32 0.0, %v727
  %v729 = vpop.f32.mrf.mxu0
  %v730 = vadd.f32 0.0, %v729
  %731 = vmatmul.bf16.gmra.mxu0 %v442
  %v732 = vpop.f32.mrf.mxu0
  %v733 = vadd.f32 0.0, %v732
  %v734 = vpop.f32.mrf.mxu0
  %v735 = vadd.f32 0.0, %v734
  %736 = vmatmul.bf16.gmra.mxu0 %v444
  %v737 = vpop.f32.mrf.mxu0
  %v738 = vadd.f32 0.0, %v737
  %v739 = vpop.f32.mrf.mxu0
  %v740 = vadd.f32 0.0, %v739
  %741 = vmatmul.bf16.gmra.mxu0 %v446
  %v742 = vpop.f32.mrf.mxu0
  %v743 = vadd.f32 0.0, %v742
  %v744 = vpop.f32.mrf.mxu0
  %v745 = vadd.f32 0.0, %v744
  %746 = vmatmul.bf16.gmra.mxu0 %v448
  %v747 = vpop.f32.mrf.mxu0
  %v748 = vadd.f32 0.0, %v747
  %v749 = vpop.f32.mrf.mxu0
  %v750 = vadd.f32 0.0, %v749
  %751 = vmatmul.bf16.gmra.mxu0 %v450
  %v752 = vpop.f32.mrf.mxu0
  %v753 = vadd.f32 0.0, %v752
  %v754 = vpop.f32.mrf.mxu0
  %v755 = vadd.f32 0.0, %v754
  %756 = vmatmul.bf16.gmra.mxu0 %v452
  %v757 = vpop.f32.mrf.mxu0
  %v758 = vadd.f32 0.0, %v757
  %v759 = vpop.f32.mrf.mxu0
  %v760 = vadd.f32 0.0, %v759
  %761 = vmatmul.bf16.gmra.mxu0 %v454
  %v762 = vpop.f32.mrf.mxu0
  %v763 = vadd.f32 0.0, %v762
  %v764 = vpop.f32.mrf.mxu0
  %v765 = vadd.f32 0.0, %v764
  %766 = vmatmul.bf16.gmra.mxu0 %v456
  %v767 = vpop.f32.mrf.mxu0
  %v768 = vadd.f32 0.0, %v767
  %v769 = vpop.f32.mrf.mxu0
  %v770 = vadd.f32 0.0, %v769
  %771 = vmatmul.bf16.gmra.mxu0 %v458
  %v772 = vpop.f32.mrf.mxu0
  %v773 = vadd.f32 0.0, %v772
  %v774 = vpop.f32.mrf.mxu0
  %v775 = vadd.f32 0.0, %v774
  %776 = vmatmul.bf16.gmra.mxu0 %v460
  %v777 = vpop.f32.mrf.mxu0
  %v778 = vadd.f32 0.0, %v777
  %v779 = vpop.f32.mrf.mxu0
  %v780 = vadd.f32 0.0, %v779
  %781 = vmatmul.bf16.gmra.mxu0 %v462
  %v782 = vpop.f32.mrf.mxu0
  %v783 = vadd.f32 0.0, %v782
  %v784 = vpop.f32.mrf.mxu0
  %v785 = vadd.f32 0.0, %v784
  %786 = vmatmul.bf16.gmra.mxu0 %v464
  %v787 = vpop.f32.mrf.mxu0
  %v788 = vadd.f32 0.0, %v787
  %v789 = vpop.f32.mrf.mxu0
  %v790 = vadd.f32 0.0, %v789
  %791 = vmatmul.bf16.gmra.mxu0 %v466
  %v792 = vpop.f32.mrf.mxu0
  %v793 = vadd.f32 0.0, %v792
  %v794 = vpop.f32.mrf.mxu0
  %v795 = vadd.f32 0.0, %v794
  %796 = vmatmul.bf16.gmra.mxu0 %v468
  %v797 = vpop.f32.mrf.mxu0
  %v798 = vadd.f32 0.0, %v797
  %v799 = vpop.f32.mrf.mxu0
  %v800 = vadd.f32 0.0, %v799
  %801 = vmatmul.bf16.gmra.mxu0 %v470
  %v802 = vpop.f32.mrf.mxu0
  %v803 = vadd.f32 0.0, %v802
  %v804 = vpop.f32.mrf.mxu0
  %v805 = vadd.f32 0.0, %v804
  %806 = vmatmul.bf16.gmra.mxu0 %v472
  %v807 = vpop.f32.mrf.mxu0
  %v808 = vadd.f32 0.0, %v807
  %v809 = vpop.f32.mrf.mxu0
  %v810 = vadd.f32 0.0, %v809
  %811 = vmatmul.bf16.gmra.mxu0 %v474
  %v812 = vpop.f32.mrf.mxu0
  %v813 = vadd.f32 0.0, %v812
  %v814 = vpop.f32.mrf.mxu0
  %v815 = vadd.f32 0.0, %v814
  %816 = vmatmul.bf16.gmra.mxu0 %v476
  %v817 = vpop.f32.mrf.mxu0
  %v818 = vadd.f32 0.0, %v817
  %v819 = vpop.f32.mrf.mxu0
  %v820 = vadd.f32 0.0, %v819
  %821 = vmatmul.bf16.gmra.mxu0 %v478
  %v822 = vpop.f32.mrf.mxu0
  %v823 = vadd.f32 0.0, %v822
  %v824 = vpop.f32.mrf.mxu0
  %v825 = vadd.f32 0.0, %v824
  %826 = vmatmul.bf16.gmra.mxu0 %v480
  %v827 = vpop.f32.mrf.mxu0
  %v828 = vadd.f32 0.0, %v827
  %v829 = vpop.f32.mrf.mxu0
  %v830 = vadd.f32 0.0, %v829
  %831 = vmatmul.bf16.gmra.mxu0 %v482
  %v832 = vpop.f32.mrf.mxu0
  %v833 = vadd.f32 0.0, %v832
  %v834 = vpop.f32.mrf.mxu0
  %v835 = vadd.f32 0.0, %v834
  %836 = vmatmul.bf16.gmra.mxu0 %v484
  %v837 = vpop.f32.mrf.mxu0
  %v838 = vadd.f32 0.0, %v837
  %v839 = vpop.f32.mrf.mxu0
  %v840 = vadd.f32 0.0, %v839
  %841 = vmatmul.bf16.gmra.mxu0 %v486
  %v842 = vpop.f32.mrf.mxu0
  %v843 = vadd.f32 0.0, %v842
  %v844 = vpop.f32.mrf.mxu0
  %v845 = vadd.f32 0.0, %v844
  %846 = vmatmul.bf16.gmra.mxu0 %v488
  %v847 = vpop.f32.mrf.mxu0
  %v848 = vadd.f32 0.0, %v847
  %v849 = vpop.f32.mrf.mxu0
  %v850 = vadd.f32 0.0, %v849
  %851 = vdwg.mxu0
  %852 = vmatpush.bf16.msra.mxu0 0
  %853 = vmatpush.bf16.msra.mxu0 0
  %854 = vmatpush.bf16.msra.mxu0 0
  %855 = vmatpush.bf16.msra.mxu0 0
  %856 = vmatpush.bf16.msra.mxu0 0
  %857 = vmatpush.bf16.msra.mxu0 0
  %858 = vmatpush.bf16.msra.mxu0 %v681
  %859 = vmatpush.bf16.msra.mxu0 %v568
  %860 = vmatmul.bf16.gmra.mxu0 %v581
  %v861 = vpop.f32.mrf.mxu0
  %v862 = vadd.f32 %v693, %v861
  %v863 = vpop.f32.mrf.mxu0
  %v864 = vadd.f32 %v695, %v863
  %865 = vmatmul.bf16.gmra.mxu0 %v584
  %v866 = vpop.f32.mrf.mxu0
  %v867 = vadd.f32 %v698, %v866
  %v868 = vpop.f32.mrf.mxu0
  %v869 = vadd.f32 %v700, %v868
  %870 = vmatmul.bf16.gmra.mxu0 %v587
  %v871 = vpop.f32.mrf.mxu0
  %v872 = vadd.f32 %v703, %v871
  %v873 = vpop.f32.mrf.mxu0
  %v874 = vadd.f32 %v705, %v873
  %875 = vmatmul.bf16.gmra.mxu0 %v590
  %v876 = vpop.f32.mrf.mxu0
  %v877 = vadd.f32 %v708, %v876
  %v878 = vpop.f32.mrf.mxu0
  %v879 = vadd.f32 %v710, %v878
  %880 = vmatmul.bf16.gmra.mxu0 %v593
  %v881 = vpop.f32.mrf.mxu0
  %v882 = vadd.f32 %v713, %v881
  %v883 = vpop.f32.mrf.mxu0
  %v884 = vadd.f32 %v715, %v883
  %885 = vmatmul.bf16.gmra.mxu0 %v596
  %v886 = vpop.f32.mrf.mxu0
  %v887 = vadd.f32 %v718, %v886
  %v888 = vpop.f32.mrf.mxu0
  %v889 = vadd.f32 %v720, %v888
  %890 = vmatmul.bf16.gmra.mxu0 %v599
  %v891 = vpop.f32.mrf.mxu0
  %v892 = vadd.f32 %v723, %v891
  %v893 = vpop.f32.mrf.mxu0
  %v894 = vadd.f32 %v725, %v893
  %895 = vmatmul.bf16.gmra.mxu0 %v602
  %v896 = vpop.f32.mrf.mxu0
  %v897 = vadd.f32 %v728, %v896
  %v898 = vpop.f32.mrf.mxu0
  %v899 = vadd.f32 %v730, %v898
  %900 = vmatmul.bf16.gmra.mxu0 %v605
  %v901 = vpop.f32.mrf.mxu0
  %v902 = vadd.f32 %v733, %v901
  %v903 = vpop.f32.mrf.mxu0
  %v904 = vadd.f32 %v735, %v903
  %905 = vmatmul.bf16.gmra.mxu0 %v608
  %v906 = vpop.f32.mrf.mxu0
  %v907 = vadd.f32 %v738, %v906
  %v908 = vpop.f32.mrf.mxu0
  %v909 = vadd.f32 %v740, %v908
  %910 = vmatmul.bf16.gmra.mxu0 %v611
  %v911 = vpop.f32.mrf.mxu0
  %v912 = vadd.f32 %v743, %v911
  %v913 = vpop.f32.mrf.mxu0
  %v914 = vadd.f32 %v745, %v913
  %915 = vmatmul.bf16.gmra.mxu0 %v614
  %v916 = vpop.f32.mrf.mxu0
  %v917 = vadd.f32 %v748, %v916
  %v918 = vpop.f32.mrf.mxu0
  %v919 = vadd.f32 %v750, %v918
  %920 = vmatmul.bf16.gmra.mxu0 %v617
  %v921 = vpop.f32.mrf.mxu0
  %v922 = vadd.f32 %v753, %v921
  %v923 = vpop.f32.mrf.mxu0
  %v924 = vadd.f32 %v755, %v923
  %925 = vmatmul.bf16.gmra.mxu0 %v620
  %v926 = vpop.f32.mrf.mxu0
  %v927 = vadd.f32 %v758, %v926
  %v928 = vpop.f32.mrf.mxu0
  %v929 = vadd.f32 %v760, %v928
  %930 = vmatmul.bf16.gmra.mxu0 %v623
  %v931 = vpop.f32.mrf.mxu0
  %v932 = vadd.f32 %v763, %v931
  %v933 = vpop.f32.mrf.mxu0
  %v934 = vadd.f32 %v765, %v933
  %935 = vmatmul.bf16.gmra.mxu0 %v626
  %v936 = vpop.f32.mrf.mxu0
  %v937 = vadd.f32 %v768, %v936
  %v938 = vpop.f32.mrf.mxu0
  %v939 = vadd.f32 %v770, %v938
  %940 = vmatmul.bf16.gmra.mxu0 %v629
  %v941 = vpop.f32.mrf.mxu0
  %v942 = vadd.f32 %v773, %v941
  %v943 = vpop.f32.mrf.mxu0
  %v944 = vadd.f32 %v775, %v943
  %945 = vmatmul.bf16.gmra.mxu0 %v632
  %v946 = vpop.f32.mrf.mxu0
  %v947 = vadd.f32 %v778, %v946
  %v948 = vpop.f32.mrf.mxu0
  %v949 = vadd.f32 %v780, %v948
  %950 = vmatmul.bf16.gmra.mxu0 %v635
  %v951 = vpop.f32.mrf.mxu0
  %v952 = vadd.f32 %v783, %v951
  %v953 = vpop.f32.mrf.mxu0
  %v954 = vadd.f32 %v785, %v953
  %955 = vmatmul.bf16.gmra.mxu0 %v638
  %v956 = vpop.f32.mrf.mxu0
  %v957 = vadd.f32 %v788, %v956
  %v958 = vpop.f32.mrf.mxu0
  %v959 = vadd.f32 %v790, %v958
  %960 = vmatmul.bf16.gmra.mxu0 %v641
  %v961 = vpop.f32.mrf.mxu0
  %v962 = vadd.f32 %v793, %v961
  %v963 = vpop.f32.mrf.mxu0
  %v964 = vadd.f32 %v795, %v963
  %965 = vmatmul.bf16.gmra.mxu0 %v644
  %v966 = vpop.f32.mrf.mxu0
  %v967 = vadd.f32 %v798, %v966
  %v968 = vpop.f32.mrf.mxu0
  %v969 = vadd.f32 %v800, %v968
  %970 = vmatmul.bf16.gmra.mxu0 %v647
  %v971 = vpop.f32.mrf.mxu0
  %v972 = vadd.f32 %v803, %v971
  %v973 = vpop.f32.mrf.mxu0
  %v974 = vadd.f32 %v805, %v973
  %975 = vmatmul.bf16.gmra.mxu0 %v650
  %v976 = vpop.f32.mrf.mxu0
  %v977 = vadd.f32 %v808, %v976
  %v978 = vpop.f32.mrf.mxu0
  %v979 = vadd.f32 %v810, %v978
  %980 = vmatmul.bf16.gmra.mxu0 %v653
  %v981 = vpop.f32.mrf.mxu0
  %v982 = vadd.f32 %v813, %v981
  %v983 = vpop.f32.mrf.mxu0
  %v984 = vadd.f32 %v815, %v983
  %985 = vmatmul.bf16.gmra.mxu0 %v656
  %v986 = vpop.f32.mrf.mxu0
  %v987 = vadd.f32 %v818, %v986
  %v988 = vpop.f32.mrf.mxu0
  %v989 = vadd.f32 %v820, %v988
  %990 = vmatmul.bf16.gmra.mxu0 %v659
  %v991 = vpop.f32.mrf.mxu0
  %v992 = vadd.f32 %v823, %v991
  %v993 = vpop.f32.mrf.mxu0
  %v994 = vadd.f32 %v825, %v993
  %995 = vmatmul.bf16.gmra.mxu0 %v662
  %v996 = vpop.f32.mrf.mxu0
  %v997 = vadd.f32 %v828, %v996
  %v998 = vpop.f32.mrf.mxu0
  %v999 = vadd.f32 %v830, %v998
  %1000 = vmatmul.bf16.gmra.mxu0 %v665
  %v1001 = vpop.f32.mrf.mxu0
  %v1002 = vadd.f32 %v833, %v1001
  %v1003 = vpop.f32.mrf.mxu0
  %v1004 = vadd.f32 %v835, %v1003
  %1005 = vmatmul.bf16.gmra.mxu0 %v668
  %v1006 = vpop.f32.mrf.mxu0
  %v1007 = vadd.f32 %v838, %v1006
  %v1008 = vpop.f32.mrf.mxu0
  %v1009 = vadd.f32 %v840, %v1008
  %1010 = vmatmul.bf16.gmra.mxu0 %v671
  %v1011 = vpop.f32.mrf.mxu0
  %v1012 = vadd.f32 %v843, %v1011
  %v1013 = vpop.f32.mrf.mxu0
  %v1014 = vadd.f32 %v845, %v1013
  %1015 = vmatmul.bf16.gmra.mxu0 %v674
  %v1016 = vpop.f32.mrf.mxu0
  %v1017 = vadd.f32 %v848, %v1016
  %v1018 = vpop.f32.mrf.mxu0
  %v1019 = vadd.f32 %v850, %v1018
  %1020 = vdwg.mxu0
  %v1021 = vadd.f32 %v87, %v862
  %v1022 = vadd.f32 %v88, %v864
  %v1023 = vadd.f32 %v89, %v867
  %v1024 = vadd.f32 %v90, %v869
  %v1025 = vadd.f32 %v91, %v872
  %v1026 = vadd.f32 %v92, %v874
  %v1027 = vadd.f32 %v93, %v877
  %v1028 = vadd.f32 %v94, %v879
  %v1029 = vadd.f32 %v95, %v882
  %v1030 = vadd.f32 %v96, %v884
  %v1031 = vadd.f32 %v97, %v887
  %v1032 = vadd.f32 %v98, %v889
  %v1033 = vadd.f32 %v99, %v892
  %v1034 = vadd.f32 %v100, %v894
  %v1035 = vadd.f32 %v101, %v897
  %v1036 = vadd.f32 %v102, %v899
  %v1037 = vadd.f32 %v103, %v902
  %v1038 = vadd.f32 %v104, %v904
  %v1039 = vadd.f32 %v105, %v907
  %v1040 = vadd.f32 %v106, %v909
  %v1041 = vadd.f32 %v107, %v912
  %v1042 = vadd.f32 %v108, %v914
  %v1043 = vadd.f32 %v109, %v917
  %v1044 = vadd.f32 %v110, %v919
  %v1045 = vadd.f32 %v111, %v922
  %v1046 = vadd.f32 %v112, %v924
  %v1047 = vadd.f32 %v113, %v927
  %v1048 = vadd.f32 %v114, %v929
  %v1049 = vadd.f32 %v115, %v932
  %v1050 = vadd.f32 %v116, %v934
  %v1051 = vadd.f32 %v117, %v937
  %v1052 = vadd.f32 %v118, %v939
  %v1053 = vadd.f32 %v119, %v942
  %v1054 = vadd.f32 %v120, %v944
  %v1055 = vadd.f32 %v121, %v947
  %v1056 = vadd.f32 %v122, %v949
  %v1057 = vadd.f32 %v123, %v952
  %v1058 = vadd.f32 %v124, %v954
  %v1059 = vadd.f32 %v125, %v957
  %v1060 = vadd.f32 %v126, %v959
  %v1061 = vadd.f32 %v127, %v962
  %v1062 = vadd.f32 %v128, %v964
  %v1063 = vadd.f32 %v129, %v967
  %v1064 = vadd.f32 %v130, %v969
  %v1065 = vadd.f32 %v131, %v972
  %v1066 = vadd.f32 %v132, %v974
  %v1067 = vadd.f32 %v133, %v977
  %v1068 = vadd.f32 %v134, %v979
  %v1069 = vadd.f32 %v135, %v982
  %v1070 = vadd.f32 %v136, %v984
  %v1071 = vadd.f32 %v137, %v987
  %v1072 = vadd.f32 %v138, %v989
  %v1073 = vadd.f32 %v139, %v992
  %v1074 = vadd.f32 %v140, %v994
  %v1075 = vadd.f32 %v141, %v997
  %v1076 = vadd.f32 %v142, %v999
  %v1077 = vadd.f32 %v143, %v1002
  %v1078 = vadd.f32 %v144, %v1004
  %v1079 = vadd.f32 %v145, %v1007
  %v1080 = vadd.f32 %v146, %v1009
  %v1081 = vadd.f32 %v147, %v1012
  %v1082 = vadd.f32 %v148, %v1014
  %v1083 = vadd.f32 %v149, %v1017
  %v1084 = vadd.f32 %v150, %v1019
  %vm1085 = vcmask 523264
  %1086 = vst.msk [vmem:[#allocation2] sm:$0xff] %vm1085, %v1021
  %1087 = vst.msk [vmem:[#allocation2 + $0x8] sm:$0xff] %vm1085, %v1022
  %1088 = vst.msk [vmem:[#allocation2 + $0x10] sm:$0xff] %vm1085, %v1023
  %1089 = vst.msk [vmem:[#allocation2 + $0x18] sm:$0xff] %vm1085, %v1024
  %1090 = vst.msk [vmem:[#allocation2 + $0x20] sm:$0xff] %vm1085, %v1025
  %1091 = vst.msk [vmem:[#allocation2 + $0x28] sm:$0xff] %vm1085, %v1026
  %1092 = vst.msk [vmem:[#allocation2 + $0x30] sm:$0xff] %vm1085, %v1027
  %1093 = vst.msk [vmem:[#allocation2 + $0x38] sm:$0xff] %vm1085, %v1028
  %1094 = vst.msk [vmem:[#allocation2 + $0x40] sm:$0xff] %vm1085, %v1029
  %1095 = vst.msk [vmem:[#allocation2 + $0x48] sm:$0xff] %vm1085, %v1030
  %1096 = vst.msk [vmem:[#allocation2 + $0x50] sm:$0xff] %vm1085, %v1031
  %1097 = vst.msk [vmem:[#allocation2 + $0x58] sm:$0xff] %vm1085, %v1032
  %1098 = vst.msk [vmem:[#allocation2 + $0x60] sm:$0xff] %vm1085, %v1033
  %1099 = vst.msk [vmem:[#allocation2 + $0x68] sm:$0xff] %vm1085, %v1034
  %1100 = vst.msk [vmem:[#allocation2 + $0x70] sm:$0xff] %vm1085, %v1035
  %1101 = vst.msk [vmem:[#allocation2 + $0x78] sm:$0xff] %vm1085, %v1036
  %1102 = vst.msk [vmem:[#allocation2 + $0x80] sm:$0xff] %vm1085, %v1037
  %1103 = vst.msk [vmem:[#allocation2 + $0x88] sm:$0xff] %vm1085, %v1038
  %1104 = vst.msk [vmem:[#allocation2 + $0x90] sm:$0xff] %vm1085, %v1039
  %1105 = vst.msk [vmem:[#allocation2 + $0x98] sm:$0xff] %vm1085, %v1040
  %1106 = vst.msk [vmem:[#allocation2 + $0xa0] sm:$0xff] %vm1085, %v1041
  %1107 = vst.msk [vmem:[#allocation2 + $0xa8] sm:$0xff] %vm1085, %v1042
  %1108 = vst.msk [vmem:[#allocation2 + $0xb0] sm:$0xff] %vm1085, %v1043
  %1109 = vst.msk [vmem:[#allocation2 + $0xb8] sm:$0xff] %vm1085, %v1044
  %1110 = vst.msk [vmem:[#allocation2 + $0xc0] sm:$0xff] %vm1085, %v1045
  %1111 = vst.msk [vmem:[#allocation2 + $0xc8] sm:$0xff] %vm1085, %v1046
  %1112 = vst.msk [vmem:[#allocation2 + $0xd0] sm:$0xff] %vm1085, %v1047
  %1113 = vst.msk [vmem:[#allocation2 + $0xd8] sm:$0xff] %vm1085, %v1048
  %1114 = vst.msk [vmem:[#allocation2 + $0xe0] sm:$0xff] %vm1085, %v1049
  %1115 = vst.msk [vmem:[#allocation2 + $0xe8] sm:$0xff] %vm1085, %v1050
  %1116 = vst.msk [vmem:[#allocation2 + $0xf0] sm:$0xff] %vm1085, %v1051
  %1117 = vst.msk [vmem:[#allocation2 + $0xf8] sm:$0xff] %vm1085, %v1052
  %1118 = vst.msk [vmem:[#allocation2 + $0x100] sm:$0xff] %vm1085, %v1053
  %1119 = vst.msk [vmem:[#allocation2 + $0x108] sm:$0xff] %vm1085, %v1054
  %1120 = vst.msk [vmem:[#allocation2 + $0x110] sm:$0xff] %vm1085, %v1055
  %1121 = vst.msk [vmem:[#allocation2 + $0x118] sm:$0xff] %vm1085, %v1056
  %1122 = vst.msk [vmem:[#allocation2 + $0x120] sm:$0xff] %vm1085, %v1057
  %1123 = vst.msk [vmem:[#allocation2 + $0x128] sm:$0xff] %vm1085, %v1058
  %1124 = vst.msk [vmem:[#allocation2 + $0x130] sm:$0xff] %vm1085, %v1059
  %1125 = vst.msk [vmem:[#allocation2 + $0x138] sm:$0xff] %vm1085, %v1060
  %1126 = vst.msk [vmem:[#allocation2 + $0x140] sm:$0xff] %vm1085, %v1061
  %1127 = vst.msk [vmem:[#allocation2 + $0x148] sm:$0xff] %vm1085, %v1062
  %1128 = vst.msk [vmem:[#allocation2 + $0x150] sm:$0xff] %vm1085, %v1063
  %1129 = vst.msk [vmem:[#allocation2 + $0x158] sm:$0xff] %vm1085, %v1064
  %1130 = vst.msk [vmem:[#allocation2 + $0x160] sm:$0xff] %vm1085, %v1065
  %1131 = vst.msk [vmem:[#allocation2 + $0x168] sm:$0xff] %vm1085, %v1066
  %1132 = vst.msk [vmem:[#allocation2 + $0x170] sm:$0xff] %vm1085, %v1067
  %1133 = vst.msk [vmem:[#allocation2 + $0x178] sm:$0xff] %vm1085, %v1068
  %1134 = vst.msk [vmem:[#allocation2 + $0x180] sm:$0xff] %vm1085, %v1069
  %1135 = vst.msk [vmem:[#allocation2 + $0x188] sm:$0xff] %vm1085, %v1070
  %1136 = vst.msk [vmem:[#allocation2 + $0x190] sm:$0xff] %vm1085, %v1071
  %1137 = vst.msk [vmem:[#allocation2 + $0x198] sm:$0xff] %vm1085, %v1072
  %1138 = vst.msk [vmem:[#allocation2 + $0x1a0] sm:$0xff] %vm1085, %v1073
  %1139 = vst.msk [vmem:[#allocation2 + $0x1a8] sm:$0xff] %vm1085, %v1074
  %1140 = vst.msk [vmem:[#allocation2 + $0x1b0] sm:$0xff] %vm1085, %v1075
  %1141 = vst.msk [vmem:[#allocation2 + $0x1b8] sm:$0xff] %vm1085, %v1076
  %1142 = vst.msk [vmem:[#allocation2 + $0x1c0] sm:$0xff] %vm1085, %v1077
  %1143 = vst.msk [vmem:[#allocation2 + $0x1c8] sm:$0xff] %vm1085, %v1078
  %1144 = vst.msk [vmem:[#allocation2 + $0x1d0] sm:$0xff] %vm1085, %v1079
  %1145 = vst.msk [vmem:[#allocation2 + $0x1d8] sm:$0xff] %vm1085, %v1080
  %1146 = vst.msk [vmem:[#allocation2 + $0x1e0] sm:$0xff] %vm1085, %v1081
  %1147 = vst.msk [vmem:[#allocation2 + $0x1e8] sm:$0xff] %vm1085, %v1082
  %1148 = vst.msk [vmem:[#allocation2 + $0x1f0] sm:$0xff] %vm1085, %v1083
  %1149 = vst.msk [vmem:[#allocation2 + $0x1f8] sm:$0xff] %vm1085, %v1084
  // Predicated region
  $region22: #{tpu_custom_call.1} parent=0 // pred_check
    %p1150 = pneg %p18
  $region23: #{tpu_custom_call.1} parent=0 // pred_check_branch
    %1152 = sbr.rel (%p1150) target = $region25
  $region24: #{tpu_custom_call.1} parent=0 // pred_region
    %v1153 = vld [vmem:[#allocation2] sm:$0xff]
    %v1154 = vld [vmem:[#allocation2 + $0x8] sm:$0xff]
    %v1155 = vld [vmem:[#allocation2 + $0x10] sm:$0xff]
    %v1156 = vld [vmem:[#allocation2 + $0x18] sm:$0xff]
    %v1157 = vld [vmem:[#allocation2 + $0x20] sm:$0xff]
    %v1158 = vld [vmem:[#allocation2 + $0x28] sm:$0xff]
    %v1159 = vld [vmem:[#allocation2 + $0x30] sm:$0xff]
    %v1160 = vld [vmem:[#allocation2 + $0x38] sm:$0xff]
    %v1161 = vld [vmem:[#allocation2 + $0x40] sm:$0xff]
    %v1162 = vld [vmem:[#allocation2 + $0x48] sm:$0xff]
    %v1163 = vld [vmem:[#allocation2 + $0x50] sm:$0xff]
    %v1164 = vld [vmem:[#allocation2 + $0x58] sm:$0xff]
    %v1165 = vld [vmem:[#allocation2 + $0x60] sm:$0xff]
    %v1166 = vld [vmem:[#allocation2 + $0x68] sm:$0xff]
    %v1167 = vld [vmem:[#allocation2 + $0x70] sm:$0xff]
    %v1168 = vld [vmem:[#allocation2 + $0x78] sm:$0xff]
    %v1169 = vld [vmem:[#allocation2 + $0x80] sm:$0xff]
    %v1170 = vld [vmem:[#allocation2 + $0x88] sm:$0xff]
    %v1171 = vld [vmem:[#allocation2 + $0x90] sm:$0xff]
    %v1172 = vld [vmem:[#allocation2 + $0x98] sm:$0xff]
    %v1173 = vld [vmem:[#allocation2 + $0xa0] sm:$0xff]
    %v1174 = vld [vmem:[#allocation2 + $0xa8] sm:$0xff]
    %v1175 = vld [vmem:[#allocation2 + $0xb0] sm:$0xff]
    %v1176 = vld [vmem:[#allocation2 + $0xb8] sm:$0xff]
    %v1177 = vld [vmem:[#allocation2 + $0xc0] sm:$0xff]
    %v1178 = vld [vmem:[#allocation2 + $0xc8] sm:$0xff]
    %v1179 = vld [vmem:[#allocation2 + $0xd0] sm:$0xff]
    %v1180 = vld [vmem:[#allocation2 + $0xd8] sm:$0xff]
    %v1181 = vld [vmem:[#allocation2 + $0xe0] sm:$0xff]
    %v1182 = vld [vmem:[#allocation2 + $0xe8] sm:$0xff]
    %v1183 = vld [vmem:[#allocation2 + $0xf0] sm:$0xff]
    %v1184 = vld [vmem:[#allocation2 + $0xf8] sm:$0xff]
    %v1185 = vld [vmem:[#allocation2 + $0x100] sm:$0xff]
    %v1186 = vld [vmem:[#allocation2 + $0x108] sm:$0xff]
    %v1187 = vld [vmem:[#allocation2 + $0x110] sm:$0xff]
    %v1188 = vld [vmem:[#allocation2 + $0x118] sm:$0xff]
    %v1189 = vld [vmem:[#allocation2 + $0x120] sm:$0xff]
    %v1190 = vld [vmem:[#allocation2 + $0x128] sm:$0xff]
    %v1191 = vld [vmem:[#allocation2 + $0x130] sm:$0xff]
    %v1192 = vld [vmem:[#allocation2 + $0x138] sm:$0xff]
    %v1193 = vld [vmem:[#allocation2 + $0x140] sm:$0xff]
    %v1194 = vld [vmem:[#allocation2 + $0x148] sm:$0xff]
    %v1195 = vld [vmem:[#allocation2 + $0x150] sm:$0xff]
    %v1196 = vld [vmem:[#allocation2 + $0x158] sm:$0xff]
    %v1197 = vld [vmem:[#allocation2 + $0x160] sm:$0xff]
    %v1198 = vld [vmem:[#allocation2 + $0x168] sm:$0xff]
    %v1199 = vld [vmem:[#allocation2 + $0x170] sm:$0xff]
    %v1200 = vld [vmem:[#allocation2 + $0x178] sm:$0xff]
    %v1201 = vld [vmem:[#allocation2 + $0x180] sm:$0xff]
    %v1202 = vld [vmem:[#allocation2 + $0x188] sm:$0xff]
    %v1203 = vld [vmem:[#allocation2 + $0x190] sm:$0xff]
    %v1204 = vld [vmem:[#allocation2 + $0x198] sm:$0xff]
    %v1205 = vld [vmem:[#allocation2 + $0x1a0] sm:$0xff]
    %v1206 = vld [vmem:[#allocation2 + $0x1a8] sm:$0xff]
    %v1207 = vld [vmem:[#allocation2 + $0x1b0] sm:$0xff]
    %v1208 = vld [vmem:[#allocation2 + $0x1b8] sm:$0xff]
    %v1209 = vld [vmem:[#allocation2 + $0x1c0] sm:$0xff]
    %v1210 = vld [vmem:[#allocation2 + $0x1c8] sm:$0xff]
    %v1211 = vld [vmem:[#allocation2 + $0x1d0] sm:$0xff]
    %v1212 = vld [vmem:[#allocation2 + $0x1d8] sm:$0xff]
    %v1213 = vld [vmem:[#allocation2 + $0x1e0] sm:$0xff]
    %v1214 = vld [vmem:[#allocation2 + $0x1e8] sm:$0xff]
    %v1215 = vld [vmem:[#allocation2 + $0x1f0] sm:$0xff]
    %v1216 = vld [vmem:[#allocation2 + $0x1f8] sm:$0xff]
    %v1217 = vld [vmem:[%s2] sm:$0x1]
    %v1219 = vperm.slane %v1217, 0
    %v1221 = vmul.f32 %v1153, %v1219
    %v1222 = vmul.f32 %v1154, %v1219
    %v1223 = vmul.f32 %v1155, %v1219
    %v1224 = vmul.f32 %v1156, %v1219
    %v1225 = vmul.f32 %v1157, %v1219
    %v1226 = vmul.f32 %v1158, %v1219
    %v1227 = vmul.f32 %v1159, %v1219
    %v1228 = vmul.f32 %v1160, %v1219
    %v1229 = vmul.f32 %v1161, %v1219
    %v1230 = vmul.f32 %v1162, %v1219
    %v1231 = vmul.f32 %v1163, %v1219
    %v1232 = vmul.f32 %v1164, %v1219
    %v1233 = vmul.f32 %v1165, %v1219
    %v1234 = vmul.f32 %v1166, %v1219
    %v1235 = vmul.f32 %v1167, %v1219
    %v1236 = vmul.f32 %v1168, %v1219
    %v1237 = vmul.f32 %v1169, %v1219
    %v1238 = vmul.f32 %v1170, %v1219
    %v1239 = vmul.f32 %v1171, %v1219
    %v1240 = vmul.f32 %v1172, %v1219
    %v1241 = vmul.f32 %v1173, %v1219
    %v1242 = vmul.f32 %v1174, %v1219
    %v1243 = vmul.f32 %v1175, %v1219
    %v1244 = vmul.f32 %v1176, %v1219
    %v1245 = vmul.f32 %v1177, %v1219
    %v1246 = vmul.f32 %v1178, %v1219
    %v1247 = vmul.f32 %v1179, %v1219
    %v1248 = vmul.f32 %v1180, %v1219
    %v1249 = vmul.f32 %v1181, %v1219
    %v1250 = vmul.f32 %v1182, %v1219
    %v1251 = vmul.f32 %v1183, %v1219
    %v1252 = vmul.f32 %v1184, %v1219
    %v1253 = vmul.f32 %v1185, %v1219
    %v1254 = vmul.f32 %v1186, %v1219
    %v1255 = vmul.f32 %v1187, %v1219
    %v1256 = vmul.f32 %v1188, %v1219
    %v1257 = vmul.f32 %v1189, %v1219
    %v1258 = vmul.f32 %v1190, %v1219
    %v1259 = vmul.f32 %v1191, %v1219
    %v1260 = vmul.f32 %v1192, %v1219
    %v1261 = vmul.f32 %v1193, %v1219
    %v1262 = vmul.f32 %v1194, %v1219
    %v1263 = vmul.f32 %v1195, %v1219
    %v1264 = vmul.f32 %v1196, %v1219
    %v1265 = vmul.f32 %v1197, %v1219
    %v1266 = vmul.f32 %v1198, %v1219
    %v1267 = vmul.f32 %v1199, %v1219
    %v1268 = vmul.f32 %v1200, %v1219
    %v1269 = vmul.f32 %v1201, %v1219
    %v1270 = vmul.f32 %v1202, %v1219
    %v1271 = vmul.f32 %v1203, %v1219
    %v1272 = vmul.f32 %v1204, %v1219
    %v1273 = vmul.f32 %v1205, %v1219
    %v1274 = vmul.f32 %v1206, %v1219
    %v1275 = vmul.f32 %v1207, %v1219
    %v1276 = vmul.f32 %v1208, %v1219
    %v1277 = vmul.f32 %v1209, %v1219
    %v1278 = vmul.f32 %v1210, %v1219
    %v1279 = vmul.f32 %v1211, %v1219
    %v1280 = vmul.f32 %v1212, %v1219
    %v1281 = vmul.f32 %v1213, %v1219
    %v1282 = vmul.f32 %v1214, %v1219
    %v1283 = vmul.f32 %v1215, %v1219
    %v1284 = vmul.f32 %v1216, %v1219
    %v1285 = vld [vmem:[%s3] sm:$0x1]
    %v1287 = vperm.slane %v1285, 0
    %v1289 = vadd.f32 %v1221, %v1287
    %v1290 = vadd.f32 %v1222, %v1287
    %v1291 = vadd.f32 %v1223, %v1287
    %v1292 = vadd.f32 %v1224, %v1287
    %v1293 = vadd.f32 %v1225, %v1287
    %v1294 = vadd.f32 %v1226, %v1287
    %v1295 = vadd.f32 %v1227, %v1287
    %v1296 = vadd.f32 %v1228, %v1287
    %v1297 = vadd.f32 %v1229, %v1287
    %v1298 = vadd.f32 %v1230, %v1287
    %v1299 = vadd.f32 %v1231, %v1287
    %v1300 = vadd.f32 %v1232, %v1287
    %v1301 = vadd.f32 %v1233, %v1287
    %v1302 = vadd.f32 %v1234, %v1287
    %v1303 = vadd.f32 %v1235, %v1287
    %v1304 = vadd.f32 %v1236, %v1287
    %v1305 = vadd.f32 %v1237, %v1287
    %v1306 = vadd.f32 %v1238, %v1287
    %v1307 = vadd.f32 %v1239, %v1287
    %v1308 = vadd.f32 %v1240, %v1287
    %v1309 = vadd.f32 %v1241, %v1287
    %v1310 = vadd.f32 %v1242, %v1287
    %v1311 = vadd.f32 %v1243, %v1287
    %v1312 = vadd.f32 %v1244, %v1287
    %v1313 = vadd.f32 %v1245, %v1287
    %v1314 = vadd.f32 %v1246, %v1287
    %v1315 = vadd.f32 %v1247, %v1287
    %v1316 = vadd.f32 %v1248, %v1287
    %v1317 = vadd.f32 %v1249, %v1287
    %v1318 = vadd.f32 %v1250, %v1287
    %v1319 = vadd.f32 %v1251, %v1287
    %v1320 = vadd.f32 %v1252, %v1287
    %v1321 = vadd.f32 %v1253, %v1287
    %v1322 = vadd.f32 %v1254, %v1287
    %v1323 = vadd.f32 %v1255, %v1287
    %v1324 = vadd.f32 %v1256, %v1287
    %v1325 = vadd.f32 %v1257, %v1287
    %v1326 = vadd.f32 %v1258, %v1287
    %v1327 = vadd.f32 %v1259, %v1287
    %v1328 = vadd.f32 %v1260, %v1287
    %v1329 = vadd.f32 %v1261, %v1287
    %v1330 = vadd.f32 %v1262, %v1287
    %v1331 = vadd.f32 %v1263, %v1287
    %v1332 = vadd.f32 %v1264, %v1287
    %v1333 = vadd.f32 %v1265, %v1287
    %v1334 = vadd.f32 %v1266, %v1287
    %v1335 = vadd.f32 %v1267, %v1287
    %v1336 = vadd.f32 %v1268, %v1287
    %v1337 = vadd.f32 %v1269, %v1287
    %v1338 = vadd.f32 %v1270, %v1287
    %v1339 = vadd.f32 %v1271, %v1287
    %v1340 = vadd.f32 %v1272, %v1287
    %v1341 = vadd.f32 %v1273, %v1287
    %v1342 = vadd.f32 %v1274, %v1287
    %v1343 = vadd.f32 %v1275, %v1287
    %v1344 = vadd.f32 %v1276, %v1287
    %v1345 = vadd.f32 %v1277, %v1287
    %v1346 = vadd.f32 %v1278, %v1287
    %v1347 = vadd.f32 %v1279, %v1287
    %v1348 = vadd.f32 %v1280, %v1287
    %v1349 = vadd.f32 %v1281, %v1287
    %v1350 = vadd.f32 %v1282, %v1287
    %v1351 = vadd.f32 %v1283, %v1287
    %v1352 = vadd.f32 %v1284, %v1287
    %v1353 = vmax.f32 %v1289, 0.0
    %v1354 = vmax.f32 %v1290, 0.0
    %v1355 = vmax.f32 %v1291, 0.0
    %v1356 = vmax.f32 %v1292, 0.0
    %v1357 = vmax.f32 %v1293, 0.0
    %v1358 = vmax.f32 %v1294, 0.0
    %v1359 = vmax.f32 %v1295, 0.0
    %v1360 = vmax.f32 %v1296, 0.0
    %v1361 = vmax.f32 %v1297, 0.0
    %v1362 = vmax.f32 %v1298, 0.0
    %v1363 = vmax.f32 %v1299, 0.0
    %v1364 = vmax.f32 %v1300, 0.0
    %v1365 = vmax.f32 %v1301, 0.0
    %v1366 = vmax.f32 %v1302, 0.0
    %v1367 = vmax.f32 %v1303, 0.0
    %v1368 = vmax.f32 %v1304, 0.0
    %v1369 = vmax.f32 %v1305, 0.0
    %v1370 = vmax.f32 %v1306, 0.0
    %v1371 = vmax.f32 %v1307, 0.0
    %v1372 = vmax.f32 %v1308, 0.0
    %v1373 = vmax.f32 %v1309, 0.0
    %v1374 = vmax.f32 %v1310, 0.0
    %v1375 = vmax.f32 %v1311, 0.0
    %v1376 = vmax.f32 %v1312, 0.0
    %v1377 = vmax.f32 %v1313, 0.0
    %v1378 = vmax.f32 %v1314, 0.0
    %v1379 = vmax.f32 %v1315, 0.0
    %v1380 = vmax.f32 %v1316, 0.0
    %v1381 = vmax.f32 %v1317, 0.0
    %v1382 = vmax.f32 %v1318, 0.0
    %v1383 = vmax.f32 %v1319, 0.0
    %v1384 = vmax.f32 %v1320, 0.0
    %v1385 = vmax.f32 %v1321, 0.0
    %v1386 = vmax.f32 %v1322, 0.0
    %v1387 = vmax.f32 %v1323, 0.0
    %v1388 = vmax.f32 %v1324, 0.0
    %v1389 = vmax.f32 %v1325, 0.0
    %v1390 = vmax.f32 %v1326, 0.0
    %v1391 = vmax.f32 %v1327, 0.0
    %v1392 = vmax.f32 %v1328, 0.0
    %v1393 = vmax.f32 %v1329, 0.0
    %v1394 = vmax.f32 %v1330, 0.0
    %v1395 = vmax.f32 %v1331, 0.0
    %v1396 = vmax.f32 %v1332, 0.0
    %v1397 = vmax.f32 %v1333, 0.0
    %v1398 = vmax.f32 %v1334, 0.0
    %v1399 = vmax.f32 %v1335, 0.0
    %v1400 = vmax.f32 %v1336, 0.0
    %v1401 = vmax.f32 %v1337, 0.0
    %v1402 = vmax.f32 %v1338, 0.0
    %v1403 = vmax.f32 %v1339, 0.0
    %v1404 = vmax.f32 %v1340, 0.0
    %v1405 = vmax.f32 %v1341, 0.0
    %v1406 = vmax.f32 %v1342, 0.0
    %v1407 = vmax.f32 %v1343, 0.0
    %v1408 = vmax.f32 %v1344, 0.0
    %v1409 = vmax.f32 %v1345, 0.0
    %v1410 = vmax.f32 %v1346, 0.0
    %v1411 = vmax.f32 %v1347, 0.0
    %v1412 = vmax.f32 %v1348, 0.0
    %v1413 = vmax.f32 %v1349, 0.0
    %v1414 = vmax.f32 %v1350, 0.0
    %v1415 = vmax.f32 %v1351, 0.0
    %v1416 = vmax.f32 %v1352, 0.0
    %v1417 = vpack.c.bf16 %v1353, %v1353
    %v1418 = vpack.c.bf16 %v1354, %v1354
    %v1419 = vpack.c.bf16 %v1355, %v1355
    %v1420 = vpack.c.bf16 %v1356, %v1356
    %v1421 = vpack.c.bf16 %v1357, %v1357
    %v1422 = vpack.c.bf16 %v1358, %v1358
    %v1423 = vpack.c.bf16 %v1359, %v1359
    %v1424 = vpack.c.bf16 %v1360, %v1360
    %v1425 = vpack.c.bf16 %v1361, %v1361
    %v1426 = vpack.c.bf16 %v1362, %v1362
    %v1427 = vpack.c.bf16 %v1363, %v1363
    %v1428 = vpack.c.bf16 %v1364, %v1364
    %v1429 = vpack.c.bf16 %v1365, %v1365
    %v1430 = vpack.c.bf16 %v1366, %v1366
    %v1431 = vpack.c.bf16 %v1367, %v1367
    %v1432 = vpack.c.bf16 %v1368, %v1368
    %v1433 = vpack.c.bf16 %v1369, %v1369
    %v1434 = vpack.c.bf16 %v1370, %v1370
    %v1435 = vpack.c.bf16 %v1371, %v1371
    %v1436 = vpack.c.bf16 %v1372, %v1372
    %v1437 = vpack.c.bf16 %v1373, %v1373
    %v1438 = vpack.c.bf16 %v1374, %v1374
    %v1439 = vpack.c.bf16 %v1375, %v1375
    %v1440 = vpack.c.bf16 %v1376, %v1376
    %v1441 = vpack.c.bf16 %v1377, %v1377
    %v1442 = vpack.c.bf16 %v1378, %v1378
    %v1443 = vpack.c.bf16 %v1379, %v1379
    %v1444 = vpack.c.bf16 %v1380, %v1380
    %v1445 = vpack.c.bf16 %v1381, %v1381
    %v1446 = vpack.c.bf16 %v1382, %v1382
    %v1447 = vpack.c.bf16 %v1383, %v1383
    %v1448 = vpack.c.bf16 %v1384, %v1384
    %v1449 = vpack.c.bf16 %v1385, %v1385
    %v1450 = vpack.c.bf16 %v1386, %v1386
    %v1451 = vpack.c.bf16 %v1387, %v1387
    %v1452 = vpack.c.bf16 %v1388, %v1388
    %v1453 = vpack.c.bf16 %v1389, %v1389
    %v1454 = vpack.c.bf16 %v1390, %v1390
    %v1455 = vpack.c.bf16 %v1391, %v1391
    %v1456 = vpack.c.bf16 %v1392, %v1392
    %v1457 = vpack.c.bf16 %v1393, %v1393
    %v1458 = vpack.c.bf16 %v1394, %v1394
    %v1459 = vpack.c.bf16 %v1395, %v1395
    %v1460 = vpack.c.bf16 %v1396, %v1396
    %v1461 = vpack.c.bf16 %v1397, %v1397
    %v1462 = vpack.c.bf16 %v1398, %v1398
    %v1463 = vpack.c.bf16 %v1399, %v1399
    %v1464 = vpack.c.bf16 %v1400, %v1400
    %v1465 = vpack.c.bf16 %v1401, %v1401
    %v1466 = vpack.c.bf16 %v1402, %v1402
    %v1467 = vpack.c.bf16 %v1403, %v1403
    %v1468 = vpack.c.bf16 %v1404, %v1404
    %v1469 = vpack.c.bf16 %v1405, %v1405
    %v1470 = vpack.c.bf16 %v1406, %v1406
    %v1471 = vpack.c.bf16 %v1407, %v1407
    %v1472 = vpack.c.bf16 %v1408, %v1408
    %v1473 = vpack.c.bf16 %v1409, %v1409
    %v1474 = vpack.c.bf16 %v1410, %v1410
    %v1475 = vpack.c.bf16 %v1411, %v1411
    %v1476 = vpack.c.bf16 %v1412, %v1412
    %v1477 = vpack.c.bf16 %v1413, %v1413
    %v1478 = vpack.c.bf16 %v1414, %v1414
    %v1479 = vpack.c.bf16 %v1415, %v1415
    %v1480 = vpack.c.bf16 %v1416, %v1416
    %vm1481 = vcmask 519168
    %1482 = vst.msk [vmem:[%s4] sm:$0xf] %vm1481, %v1417
    %1483 = vst.msk [vmem:[%s4 + $0x4] sm:$0xf] %vm1481, %v1418
    %1484 = vst.msk [vmem:[%s4 + $0x8] sm:$0xf] %vm1481, %v1419
    %1485 = vst.msk [vmem:[%s4 + $0xc] sm:$0xf] %vm1481, %v1420
    %1486 = vst.msk [vmem:[%s4 + $0x10] sm:$0xf] %vm1481, %v1421
    %1487 = vst.msk [vmem:[%s4 + $0x14] sm:$0xf] %vm1481, %v1422
    %1488 = vst.msk [vmem:[%s4 + $0x18] sm:$0xf] %vm1481, %v1423
    %1489 = vst.msk [vmem:[%s4 + $0x1c] sm:$0xf] %vm1481, %v1424
    %1490 = vst.msk [vmem:[%s4 + $0x20] sm:$0xf] %vm1481, %v1425
    %1491 = vst.msk [vmem:[%s4 + $0x24] sm:$0xf] %vm1481, %v1426
    %1492 = vst.msk [vmem:[%s4 + $0x28] sm:$0xf] %vm1481, %v1427
    %1493 = vst.msk [vmem:[%s4 + $0x2c] sm:$0xf] %vm1481, %v1428
    %1494 = vst.msk [vmem:[%s4 + $0x30] sm:$0xf] %vm1481, %v1429
    %1495 = vst.msk [vmem:[%s4 + $0x34] sm:$0xf] %vm1481, %v1430
    %1496 = vst.msk [vmem:[%s4 + $0x38] sm:$0xf] %vm1481, %v1431
    %1497 = vst.msk [vmem:[%s4 + $0x3c] sm:$0xf] %vm1481, %v1432
    %1498 = vst.msk [vmem:[%s4 + $0x40] sm:$0xf] %vm1481, %v1433
    %1499 = vst.msk [vmem:[%s4 + $0x44] sm:$0xf] %vm1481, %v1434
    %1500 = vst.msk [vmem:[%s4 + $0x48] sm:$0xf] %vm1481, %v1435
    %1501 = vst.msk [vmem:[%s4 + $0x4c] sm:$0xf] %vm1481, %v1436
    %1502 = vst.msk [vmem:[%s4 + $0x50] sm:$0xf] %vm1481, %v1437
    %1503 = vst.msk [vmem:[%s4 + $0x54] sm:$0xf] %vm1481, %v1438
    %1504 = vst.msk [vmem:[%s4 + $0x58] sm:$0xf] %vm1481, %v1439
    %1505 = vst.msk [vmem:[%s4 + $0x5c] sm:$0xf] %vm1481, %v1440
    %1506 = vst.msk [vmem:[%s4 + $0x60] sm:$0xf] %vm1481, %v1441
    %1507 = vst.msk [vmem:[%s4 + $0x64] sm:$0xf] %vm1481, %v1442
    %1508 = vst.msk [vmem:[%s4 + $0x68] sm:$0xf] %vm1481, %v1443
    %1509 = vst.msk [vmem:[%s4 + $0x6c] sm:$0xf] %vm1481, %v1444
    %1510 = vst.msk [vmem:[%s4 + $0x70] sm:$0xf] %vm1481, %v1445
    %1511 = vst.msk [vmem:[%s4 + $0x74] sm:$0xf] %vm1481, %v1446
    %1512 = vst.msk [vmem:[%s4 + $0x78] sm:$0xf] %vm1481, %v1447
    %1513 = vst.msk [vmem:[%s4 + $0x7c] sm:$0xf] %vm1481, %v1448
    %1514 = vst.msk [vmem:[%s4 + $0x80] sm:$0xf] %vm1481, %v1449
    %1515 = vst.msk [vmem:[%s4 + $0x84] sm:$0xf] %vm1481, %v1450
    %1516 = vst.msk [vmem:[%s4 + $0x88] sm:$0xf] %vm1481, %v1451
    %1517 = vst.msk [vmem:[%s4 + $0x8c] sm:$0xf] %vm1481, %v1452
    %1518 = vst.msk [vmem:[%s4 + $0x90] sm:$0xf] %vm1481, %v1453
    %1519 = vst.msk [vmem:[%s4 + $0x94] sm:$0xf] %vm1481, %v1454
    %1520 = vst.msk [vmem:[%s4 + $0x98] sm:$0xf] %vm1481, %v1455
    %1521 = vst.msk [vmem:[%s4 + $0x9c] sm:$0xf] %vm1481, %v1456
    %1522 = vst.msk [vmem:[%s4 + $0xa0] sm:$0xf] %vm1481, %v1457
    %1523 = vst.msk [vmem:[%s4 + $0xa4] sm:$0xf] %vm1481, %v1458
    %1524 = vst.msk [vmem:[%s4 + $0xa8] sm:$0xf] %vm1481, %v1459
    %1525 = vst.msk [vmem:[%s4 + $0xac] sm:$0xf] %vm1481, %v1460
    %1526 = vst.msk [vmem:[%s4 + $0xb0] sm:$0xf] %vm1481, %v1461
    %1527 = vst.msk [vmem:[%s4 + $0xb4] sm:$0xf] %vm1481, %v1462
    %1528 = vst.msk [vmem:[%s4 + $0xb8] sm:$0xf] %vm1481, %v1463
    %1529 = vst.msk [vmem:[%s4 + $0xbc] sm:$0xf] %vm1481, %v1464
    %1530 = vst.msk [vmem:[%s4 + $0xc0] sm:$0xf] %vm1481, %v1465
    %1531 = vst.msk [vmem:[%s4 + $0xc4] sm:$0xf] %vm1481, %v1466
    %1532 = vst.msk [vmem:[%s4 + $0xc8] sm:$0xf] %vm1481, %v1467
    %1533 = vst.msk [vmem:[%s4 + $0xcc] sm:$0xf] %vm1481, %v1468
    %1534 = vst.msk [vmem:[%s4 + $0xd0] sm:$0xf] %vm1481, %v1469
    %1535 = vst.msk [vmem:[%s4 + $0xd4] sm:$0xf] %vm1481, %v1470
    %1536 = vst.msk [vmem:[%s4 + $0xd8] sm:$0xf] %vm1481, %v1471
    %1537 = vst.msk [vmem:[%s4 + $0xdc] sm:$0xf] %vm1481, %v1472
    %1538 = vst.msk [vmem:[%s4 + $0xe0] sm:$0xf] %vm1481, %v1473
    %1539 = vst.msk [vmem:[%s4 + $0xe4] sm:$0xf] %vm1481, %v1474
    %1540 = vst.msk [vmem:[%s4 + $0xe8] sm:$0xf] %vm1481, %v1475
    %1541 = vst.msk [vmem:[%s4 + $0xec] sm:$0xf] %vm1481, %v1476
    %1542 = vst.msk [vmem:[%s4 + $0xf0] sm:$0xf] %vm1481, %v1477
    %1543 = vst.msk [vmem:[%s4 + $0xf4] sm:$0xf] %vm1481, %v1478
    %1544 = vst.msk [vmem:[%s4 + $0xf8] sm:$0xf] %vm1481, %v1479
    %1545 = vst.msk [vmem:[%s4 + $0xfc] sm:$0xf] %vm1481, %v1480
  $region25: #{tpu_custom_call.1} parent=0 // pred_fallthru
    _
  // Predicated region
  $region26: #{tpu_custom_call.1} parent=0 // pred_check
    _
  $region27: #{tpu_custom_call.1} parent=0 // pred_check_branch
    %1547 = sbr.rel (0) target = $region29
  $region28: #{tpu_custom_call.1} parent=0 // pred_region
    _
  $region29: #{tpu_custom_call.1} parent=0 // pred_fallthru
    _
  // Predicated region
  $region30: #{tpu_custom_call.1} parent=0 // pred_check
    _
  $region31: #{tpu_custom_call.1} parent=0 // pred_check_branch
    %1549 = sbr.rel (0) target = $region33
  $region32: #{tpu_custom_call.1} parent=0 // pred_region
    _
  $region33: #{tpu_custom_call.1} parent=0 // pred_fallthru
    _

</llo_original>
